<compile_context>
chip_gen: v6e
topology: v6e:2x2x1
jax: 0.10.0
libtpu: 0.0.40
codegen_flags: <defaults>
</compile_context>

<pallas_src>
import functools

import jax
import jax.numpy as jnp
from jax.experimental import pallas as pl
from jax.experimental.pallas import tpu as pltpu

EPS = 1e-5


def _round_up(v, m):
    return ((v + m - 1) // m) * m


# ------------------------------- fused kernel ------------------------------- #

def _fused_block_kernel(x_ref, w1_ref, w2_ref, wf_ref, o_ref, *, Wp, Go):
    """One batch-chunk per grid step; all intermediates stay in VMEM.

    x_ref : (Rt, Cin+1)      shared-halo tall plane (Rt = Go + 3*Wp), last channel is
                             the interior indicator (1 at content pixels, 0 at halo).
    w1_ref: (Cin+1, f1)      [w1 * s1 ; b1]           (BN1 folded)
    w2_ref: (3, 3*f1, f2)    per-dy stacked dx taps, column-scaled by s2 (BN2 scale)
    wf_ref: (f2+Cin+1, f3)   [w3*s3 ; w_sc*ssc ; b2@ (w3*s3) + b3 + bsc]
    o_ref : (Go, f3)         output rows g = img*(Ho+1)*Wp + ho*Wp + wo (junk trimmed
                             by the wrapper).
    """
    f32 = jnp.float32
    Lc = Go + 2 * Wp
    xa = x_ref[...]                                               # (Rt, Cin+1)

    # conv1x1(stride folded by wrapper) + BN1: scale in the weights, bias carried by
    # the ones-channel -> y1 is exactly 0 at every halo position.
    y1 = jnp.dot(xa, w1_ref[...], preferred_element_type=f32)     # (Rt, f1)

    # dx-concat: each dy matmul contracts K = 3*f1 (accumulation lives in the MXU).
    y1c = jnp.concatenate(
        [y1[0:Lc], y1[1:1 + Lc], y1[2:2 + Lc]], axis=-1)          # (Lc, 3*f1)

    # 3x3 conv (+ BN2 scale) as 3 sublane-aligned dy slabs (Wp is a multiple of 8).
    acc = jnp.dot(y1c[0:Go], w2_ref[0], preferred_element_type=f32)
    acc = acc + jnp.dot(y1c[Wp:Wp + Go], w2_ref[1], preferred_element_type=f32)
    acc = acc + jnp.dot(y1c[2 * Wp:2 * Wp + Go], w2_ref[2],
                        preferred_element_type=f32)               # (Go, f2)

    # Shortcut input = centre-tap slab of the raw input (incl. ones channel), merged
    # with the final 1x1 into a single MXU call; the ones channel times the last row
    # of wf adds (b2@w3s3 + b3 + bsc) only at valid output positions.
    xc = xa[Wp + 1:Wp + 1 + Go]                                   # (Go, Cin+1)
    z = jnp.concatenate([acc, xc], axis=-1)                       # (Go, f2+Cin+1)
    o_ref[...] = jnp.dot(z, wf_ref[...],
                         preferred_element_type=f32).astype(o_ref.dtype)


# ------------------------------ module forward ------------------------------ #

def _fold_bn(gamma, beta, mean, var):
    scale = gamma / jnp.sqrt(var + EPS)
    bias = beta - mean * scale
    return scale, bias


def down_sample_block(x_nchw, params, s, block_batch=None):
    N, Cin, H, W = x_nchw.shape
    f1 = params["w1"].shape[1]
    f2 = params["w2"].shape[3]
    f3 = params["w3"].shape[1]
    Cin1 = Cin + 1

    # ---- fold BN scales/biases into packed weights (done once, in the wrapper) ----
    s1, b1 = _fold_bn(*params["bn1"])
    s2, b2 = _fold_bn(*params["bn2"])
    s3, b3 = _fold_bn(*params["bn3"])
    ssc, bsc = _fold_bn(*params["bn_sc"])

    w1a = jnp.concatenate([params["w1"] * s1[None, :], b1[None, :]], axis=0)  # (Cin+1,f1)
    w2cat = (params["w2"] * s2).reshape(3, 3 * f1, f2)                        # (3,3f1,f2)
    w3s = params["w3"] * s3[None, :]                                          # (f2,f3)
    wscs = params["w_sc"] * ssc[None, :]                                      # (Cin,f3)
    b_fin = b2 @ w3s + b3 + bsc                                               # (f3,)
    wfin = jnp.concatenate([w3s, wscs, b_fin[None, :]], axis=0)               # (f2+Cin+1,f3)

    # ---- build the shared-halo tall plane (stride fold + NHWC + pad + flatten) ----
    xs = x_nchw[:, :, ::s, ::s].astype(jnp.float32)               # (N, Cin, Ho, Wo)
    Ho, Wo = xs.shape[2], xs.shape[3]
    Wp = _round_up(Wo + 2, 8)                                     # aligned dy offsets

    x_nhwc = jnp.transpose(xs, (0, 2, 3, 1))                      # (N, Ho, Wo, Cin)
    xa = jnp.concatenate(
        [x_nhwc, jnp.ones((N, Ho, Wo, 1), jnp.float32)], axis=-1)  # + interior channel

    # chunk the batch; each chunk is one grid step with all images folded into M
    if block_batch is None:
        per_img = 4 * (Ho + 1) * Wp * (2 * Cin1 + 4 * f1 + 2 * f2 + f3)
        block_batch = max(1, min(N, (8 * 1024 * 1024) // max(per_img, 1)))
    Nb = max(1, min(block_batch, N))
    Np = _round_up(N, Nb)
    if Np > N:
        xa = jnp.pad(xa, ((0, Np - N), (0, 0), (0, 0), (0, 0)))

    # width halo/alignment pad + one zero halo row after each image
    xa = jnp.pad(xa, ((0, 0), (0, 1), (1, Wp - Wo - 1), (0, 0)))  # (Np, Ho+1, Wp, Cin+1)
    num_chunks = Np // Nb
    Go = Nb * (Ho + 1) * Wp
    Rt = Go + 3 * Wp
    xa = xa.reshape(num_chunks, Nb * (Ho + 1) * Wp, Cin1)
    xa = jnp.pad(xa, ((0, 0), (Wp, 2 * Wp), (0, 0)))              # top halo + tail zeros
    x_plane = xa.reshape(num_chunks * Rt, Cin1)

    kernel = functools.partial(_fused_block_kernel, Wp=Wp, Go=Go)

    out_plane = pl.pallas_call(
        kernel,
        out_shape=jax.ShapeDtypeStruct((num_chunks * Go, f3), jnp.float32),
        grid=(num_chunks,),
        in_specs=[
            pl.BlockSpec((Rt, Cin1), lambda i: (i, 0)),           # x plane (per chunk)
            pl.BlockSpec((Cin1, f1), lambda i: (0, 0)),           # packed conv1+BN1
            pl.BlockSpec((3, 3 * f1, f2), lambda i: (0, 0, 0)),   # packed conv3x3+BN2
            pl.BlockSpec((f2 + Cin1, f3), lambda i: (0, 0)),      # packed conv3/shortcut/bias
        ],
        out_specs=pl.BlockSpec((Go, f3), lambda i: (i, 0)),
        compiler_params=pltpu.CompilerParams(
            dimension_semantics=("parallel",),
            vmem_limit_bytes=32 * 1024 * 1024),
    )(x_plane, w1a, w2cat, wfin)

    # trim junk row-block / pad columns, drop batch padding, back to NCHW
    out = out_plane.reshape(num_chunks, Nb, Ho + 1, Wp, f3)[:, :, :Ho, :Wo, :]
    out = out.reshape(Np, Ho, Wo, f3)[:N]
    return jnp.transpose(out, (0, 3, 1, 2))


# ------------------------- params & pure-JAX reference ----------------------- #

def init_params(key, in_channel, filters):
    f1, f2, f3 = filters
    ks = jax.random.split(key, 8)

    def conv_w(k, shape, fan_in):
        return jax.random.normal(k, shape, jnp.float32) / jnp.sqrt(float(fan_in))

    def bn_p(k, c):
        k1, k2, k3, k4 = jax.random.split(k, 4)
        gamma = 1.0 + 0.1 * jax.random.normal(k1, (c,), jnp.float32)
        beta = 0.1 * jax.random.normal(k2, (c,), jnp.float32)
        mean = 0.1 * jax.random.normal(k3, (c,), jnp.float32)
        var = jnp.abs(jax.random.normal(k4, (c,), jnp.float32)) + 0.5
        return gamma, beta, mean, var

    return {
        "w1": conv_w(ks[0], (in_channel, f1), in_channel),   # 1x1 as (Cin, Cout)
        "w2": conv_w(ks[1], (3, 3, f1, f2), 9 * f1),         # 3x3 HWIO
        "w3": conv_w(ks[2], (f2, f3), f2),
        "w_sc": conv_w(ks[3], (in_channel, f3), in_channel),
        "bn1": bn_p(ks[4], f1),
        "bn2": bn_p(ks[5], f2),
        "bn3": bn_p(ks[6], f3),
        "bn_sc": bn_p(ks[7], f3),
    }


def reference(x_nchw, params, s):
    x = jnp.transpose(x_nchw, (0, 2, 3, 1)).astype(jnp.float32)

    def conv(v, w, stride, pad):
        return jax.lax.conv_general_dilated(
            v, w, (stride, stride), pad,
            dimension_numbers=("NHWC", "HWIO", "NHWC"))

    def bn(v, p):
        g, b, m, var = p
        return (v - m) / jnp.sqrt(var + EPS) * g + b

    res = bn(conv(x, params["w_sc"][None, None], s, "VALID"), params["bn_sc"])
    y = bn(conv(x, params["w1"][None, None], s, "VALID"), params["bn1"])
    y = bn(conv(y, params["w2"], 1, [(1, 1), (1, 1)]), params["bn2"])
    y = bn(conv(y, params["w3"][None, None], 1, "VALID"), params["bn3"])
    return jnp.transpose(y + res, (0, 3, 1, 2))


# ----------------------------------- main ----------------------------------- #

if __name__ == "__main__":
    key = jax.random.PRNGKey(0)
    k_x, k_p = jax.random.split(key)

    in_channel, filters, s = 4, (8, 8, 16), 2
    x = jax.random.normal(k_x, (2, in_channel, 16, 16), jnp.float32)
    params = init_params(k_p, in_channel, filters)

    fwd = jax.jit(functools.partial(down_sample_block, s=s))
    out = jax.block_until_ready(fwd(x, params))

    assert out.shape == (2, filters[2], 16 // s, 16 // s), out.shape

    ref = reference(x, params, s)
    max_err = float(jnp.max(jnp.abs(out - ref)))
    assert jnp.allclose(out, ref, atol=1e-3, rtol=1e-3), f"max abs err {max_err}"

    print("KERNEL_OK")
</pallas_src>

<mosaic_0001>
module attributes {stable_mosaic.version = 11 : i64} {
  func.func @_fused_block_kernel(%arg0: i32, %arg1: memref<336x5xf32, #tpu.memory_space<vmem>>, %arg2: memref<5x8xf32, #tpu.memory_space<vmem>>, %arg3: memref<3x24x8xf32, #tpu.memory_space<vmem>>, %arg4: memref<13x16xf32, #tpu.memory_space<vmem>>, %arg5: memref<288x16xf32, #tpu.memory_space<vmem>>) attributes {dimension_semantics = [#tpu.dimension_semantics<parallel>], iteration_bounds = array<i64: 1>, scalar_prefetch = 0 : i64, scratch_operands = 0 : i64, tpu.core_type = #tpu.core_type<tc>, window_params = [{transform_indices = @transform_0, window_bounds = array<i64: 336, 5>}, {pipeline_mode = #tpu.pipeline_mode<synchronous>, transform_indices = @transform_1, window_bounds = array<i64: 5, 8>}, {pipeline_mode = #tpu.pipeline_mode<synchronous>, transform_indices = @transform_2, window_bounds = array<i64: 3, 24, 8>}, {pipeline_mode = #tpu.pipeline_mode<synchronous>, transform_indices = @transform_3, window_bounds = array<i64: 13, 16>}, {transform_indices = @transform_4, window_bounds = array<i64: 288, 16>}]} {
    %c0 = arith.constant 0 : index
    %c0_0 = arith.constant 0 : index
    %0 = vector.load %arg1[%c0, %c0_0] : memref<336x5xf32, #tpu.memory_space<vmem>>, vector<336x5xf32>
    %c0_1 = arith.constant 0 : index
    %c0_2 = arith.constant 0 : index
    %1 = vector.load %arg2[%c0_1, %c0_2] : memref<5x8xf32, #tpu.memory_space<vmem>>, vector<5x8xf32>
    %cst = arith.constant dense<0.000000e+00> : vector<336x8xf32>
    %2 = tpu.matmul %0, %1, %cst {dimension_numbers = #tpu.dot_dimension_numbers<[1], [0], [0], [1], [0, 0, 1, 1], [], []>} : vector<336x5xf32>, vector<5x8xf32>, vector<336x8xf32> -> vector<336x8xf32>
    %3 = vector.extract_strided_slice %2 {offsets = [0, 0], sizes = [320, 8], strides = [1, 1]} : vector<336x8xf32> to vector<320x8xf32>
    %4 = vector.extract_strided_slice %2 {offsets = [1, 0], sizes = [320, 8], strides = [1, 1]} : vector<336x8xf32> to vector<320x8xf32>
    %5 = vector.extract_strided_slice %2 {offsets = [2, 0], sizes = [320, 8], strides = [1, 1]} : vector<336x8xf32> to vector<320x8xf32>
    %6 = tpu.concatenate %3, %4, %5 in 1 : vector<320x8xf32>, vector<320x8xf32>, vector<320x8xf32> -> vector<320x24xf32>
    %7 = vector.extract_strided_slice %6 {offsets = [0, 0], sizes = [288, 24], strides = [1, 1]} : vector<320x24xf32> to vector<288x24xf32>
    %c0_3 = arith.constant 0 : index
    %c0_4 = arith.constant 0 : index
    %c0_5 = arith.constant 0 : index
    %8 = vector.load %arg3[%c0_3, %c0_4, %c0_5] : memref<3x24x8xf32, #tpu.memory_space<vmem>>, vector<1x24x8xf32>
    %9 = vector.shape_cast %8 : vector<1x24x8xf32> to vector<24x8xf32>
    %cst_6 = arith.constant dense<0.000000e+00> : vector<288x8xf32>
    %10 = tpu.matmul %7, %9, %cst_6 {dimension_numbers = #tpu.dot_dimension_numbers<[1], [0], [0], [1], [0, 0, 1, 1], [], []>} : vector<288x24xf32>, vector<24x8xf32>, vector<288x8xf32> -> vector<288x8xf32>
    %11 = vector.extract_strided_slice %6 {offsets = [16, 0], sizes = [288, 24], strides = [1, 1]} : vector<320x24xf32> to vector<288x24xf32>
    %c1 = arith.constant 1 : index
    %c0_7 = arith.constant 0 : index
    %c0_8 = arith.constant 0 : index
    %12 = vector.load %arg3[%c1, %c0_7, %c0_8] : memref<3x24x8xf32, #tpu.memory_space<vmem>>, vector<1x24x8xf32>
    %13 = vector.shape_cast %12 : vector<1x24x8xf32> to vector<24x8xf32>
    %cst_9 = arith.constant dense<0.000000e+00> : vector<288x8xf32>
    %14 = tpu.matmul %11, %13, %cst_9 {dimension_numbers = #tpu.dot_dimension_numbers<[1], [0], [0], [1], [0, 0, 1, 1], [], []>} : vector<288x24xf32>, vector<24x8xf32>, vector<288x8xf32> -> vector<288x8xf32>
    %15 = arith.addf %10, %14 : vector<288x8xf32>
    %16 = vector.extract_strided_slice %6 {offsets = [32, 0], sizes = [288, 24], strides = [1, 1]} : vector<320x24xf32> to vector<288x24xf32>
    %c2 = arith.constant 2 : index
    %c0_10 = arith.constant 0 : index
    %c0_11 = arith.constant 0 : index
    %17 = vector.load %arg3[%c2, %c0_10, %c0_11] : memref<3x24x8xf32, #tpu.memory_space<vmem>>, vector<1x24x8xf32>
    %18 = vector.shape_cast %17 : vector<1x24x8xf32> to vector<24x8xf32>
    %cst_12 = arith.constant dense<0.000000e+00> : vector<288x8xf32>
    %19 = tpu.matmul %16, %18, %cst_12 {dimension_numbers = #tpu.dot_dimension_numbers<[1], [0], [0], [1], [0, 0, 1, 1], [], []>} : vector<288x24xf32>, vector<24x8xf32>, vector<288x8xf32> -> vector<288x8xf32>
    %20 = arith.addf %15, %19 : vector<288x8xf32>
    %21 = vector.extract_strided_slice %0 {offsets = [17, 0], sizes = [288, 5], strides = [1, 1]} : vector<336x5xf32> to vector<288x5xf32>
    %22 = tpu.concatenate %20, %21 in 1 : vector<288x8xf32>, vector<288x5xf32> -> vector<288x13xf32>
    %c0_13 = arith.constant 0 : index
    %c0_14 = arith.constant 0 : index
    %23 = vector.load %arg4[%c0_13, %c0_14] : memref<13x16xf32, #tpu.memory_space<vmem>>, vector<13x16xf32>
    %cst_15 = arith.constant dense<0.000000e+00> : vector<288x16xf32>
    %24 = tpu.matmul %22, %23, %cst_15 {dimension_numbers = #tpu.dot_dimension_numbers<[1], [0], [0], [1], [0, 0, 1, 1], [], []>} : vector<288x13xf32>, vector<13x16xf32>, vector<288x16xf32> -> vector<288x16xf32>
    %c0_16 = arith.constant 0 : index
    %c0_17 = arith.constant 0 : index
    %25 = vector.load %arg5[%c0_16, %c0_17] : memref<288x16xf32, #tpu.memory_space<vmem>>, vector<288x16xf32>
    tpu.vector_store %arg5[%c0_16, %c0_17], %24 {strides = array<i32>} : memref<288x16xf32, #tpu.memory_space<vmem>>, vector<288x16xf32>,
    return
  }
  func.func @transform_0(%arg0: i32) -> (i32, i32) {
    %c0_i32 = arith.constant 0 : i32
    %c0_i32_0 = arith.constant 0 : i32
    return %arg0, %c0_i32 : i32, i32
  }
  func.func @transform_1(%arg0: i32) -> (i32, i32) {
    %c0_i32 = arith.constant 0 : i32
    %c0_i32_0 = arith.constant 0 : i32
    %c0_i32_1 = arith.constant 0 : i32
    return %c0_i32, %c0_i32_0 : i32, i32
  }
  func.func @transform_2(%arg0: i32) -> (i32, i32, i32) {
    %c0_i32 = arith.constant 0 : i32
    %c0_i32_0 = arith.constant 0 : i32
    %c0_i32_1 = arith.constant 0 : i32
    %c0_i32_2 = arith.constant 0 : i32
    return %c0_i32, %c0_i32_0, %c0_i32_1 : i32, i32, i32
  }
  func.func @transform_3(%arg0: i32) -> (i32, i32) {
    %c0_i32 = arith.constant 0 : i32
    %c0_i32_0 = arith.constant 0 : i32
    %c0_i32_1 = arith.constant 0 : i32
    return %c0_i32, %c0_i32_0 : i32, i32
  }
  func.func @transform_4(%arg0: i32) -> (i32, i32) {
    %c0_i32 = arith.constant 0 : i32
    %c0_i32_0 = arith.constant 0 : i32
    return %arg0, %c0_i32 : i32, i32
  }
}

</mosaic_0001>

<llo_original>
// kernel: down_sample_block.1
$region0: #{down_sample_block.1}
  #allocation0 [shape = 'u32[]', space=smem, size = 0x4, offset = 0x4, fixed_abs, tag = 'smem constant byte address 0x4 - core index']
  #allocation1 [shape = 'u32[144,128]{1,0:T(1,128)}', space=vmem, size = 0x12000, scoped, tag = 'internal scratch']
  %s0 = inlined_call_operand.vmem [shape: f32[336,5], index: 0, kind: input, shape index: {}]
  %s1 = inlined_call_operand.vmem [shape: f32[5,8], index: 1, kind: input, shape index: {}]
  %s2 = inlined_call_operand.vmem [shape: f32[3,24,8], index: 2, kind: input, shape index: {}]
  %s3 = inlined_call_operand.vmem [shape: f32[13,16], index: 3, kind: input, shape index: {}]
  %s4 = inlined_call_operand.vmem [shape: f32[288,16], index: 4, kind: output, shape index: {}]
  %s5 = sld [smem:[#allocation0]]
  $region26: #{down_sample_block.1} parent=0
    _
  %s7 = ssub.s32 1, %s5
  %s8 = scalar_select 0, %s7, %s5
  // Predicated region
  $region2: #{down_sample_block.1} parent=0 // pred_check
    _
  $region3: #{down_sample_block.1} parent=0 // pred_check_branch
    %10 = sbr.rel (0) target = $region5
  $region4: #{down_sample_block.1} parent=0 // pred_region
    _
  $region5: #{down_sample_block.1} parent=0 // pred_fallthru
    _
  // Predicated region
  $region6: #{down_sample_block.1} parent=0 // pred_check
    _
  $region7: #{down_sample_block.1} parent=0 // pred_check_branch
    %12 = sbr.rel (0) target = $region9
  $region8: #{down_sample_block.1} parent=0 // pred_region
    _
  $region9: #{down_sample_block.1} parent=0 // pred_fallthru
    _
  // Predicated region
  $region10: #{down_sample_block.1} parent=0 // pred_check
    _
  $region11: #{down_sample_block.1} parent=0 // pred_check_branch
    %14 = sbr.rel (0) target = $region13
  $region12: #{down_sample_block.1} parent=0 // pred_region
    _
  $region13: #{down_sample_block.1} parent=0 // pred_fallthru
    _
  // Predicated region
  $region14: #{down_sample_block.1} parent=0 // pred_check
    _
  $region15: #{down_sample_block.1} parent=0 // pred_check_branch
    %16 = sbr.rel (0) target = $region17
  $region16: #{down_sample_block.1} parent=0 // pred_region
    _
  $region17: #{down_sample_block.1} parent=0 // pred_fallthru
    _
  %v17 = vld [vmem:[%s0] sm:$0xff]
  %v18 = vld [vmem:[%s0 + $0x8] sm:$0xff]
  %v19 = vld [vmem:[%s0 + $0x10] sm:$0xff]
  %v20 = vld [vmem:[%s0 + $0x18] sm:$0xff]
  %v21 = vld [vmem:[%s0 + $0x20] sm:$0xff]
  %v22 = vld [vmem:[%s0 + $0x28] sm:$0xff]
  %v23 = vld [vmem:[%s0 + $0x30] sm:$0xff]
  %v24 = vld [vmem:[%s0 + $0x38] sm:$0xff]
  %v25 = vld [vmem:[%s0 + $0x40] sm:$0xff]
  %v26 = vld [vmem:[%s0 + $0x48] sm:$0xff]
  %v27 = vld [vmem:[%s0 + $0x50] sm:$0xff]
  %v28 = vld [vmem:[%s0 + $0x58] sm:$0xff]
  %v29 = vld [vmem:[%s0 + $0x60] sm:$0xff]
  %v30 = vld [vmem:[%s0 + $0x68] sm:$0xff]
  %v31 = vld [vmem:[%s0 + $0x70] sm:$0xff]
  %v32 = vld [vmem:[%s0 + $0x78] sm:$0xff]
  %v33 = vld [vmem:[%s0 + $0x80] sm:$0xff]
  %v34 = vld [vmem:[%s0 + $0x88] sm:$0xff]
  %v35 = vld [vmem:[%s0 + $0x90] sm:$0xff]
  %v36 = vld [vmem:[%s0 + $0x98] sm:$0xff]
  %v37 = vld [vmem:[%s0 + $0xa0] sm:$0xff]
  %v38 = vld [vmem:[%s0 + $0xa8] sm:$0xff]
  %v39 = vld [vmem:[%s0 + $0xb0] sm:$0xff]
  %v40 = vld [vmem:[%s0 + $0xb8] sm:$0xff]
  %v41 = vld [vmem:[%s0 + $0xc0] sm:$0xff]
  %v42 = vld [vmem:[%s0 + $0xc8] sm:$0xff]
  %v43 = vld [vmem:[%s0 + $0xd0] sm:$0xff]
  %v44 = vld [vmem:[%s0 + $0xd8] sm:$0xff]
  %v45 = vld [vmem:[%s0 + $0xe0] sm:$0xff]
  %v46 = vld [vmem:[%s0 + $0xe8] sm:$0xff]
  %v47 = vld [vmem:[%s0 + $0xf0] sm:$0xff]
  %v48 = vld [vmem:[%s0 + $0xf8] sm:$0xff]
  %v49 = vld [vmem:[%s0 + $0x100] sm:$0xff]
  %v50 = vld [vmem:[%s0 + $0x108] sm:$0xff]
  %v51 = vld [vmem:[%s0 + $0x110] sm:$0xff]
  %v52 = vld [vmem:[%s0 + $0x118] sm:$0xff]
  %v53 = vld [vmem:[%s0 + $0x120] sm:$0xff]
  %v54 = vld [vmem:[%s0 + $0x128] sm:$0xff]
  %v55 = vld [vmem:[%s0 + $0x130] sm:$0xff]
  %v56 = vld [vmem:[%s0 + $0x138] sm:$0xff]
  %v57 = vld [vmem:[%s0 + $0x140] sm:$0xff]
  %v58 = vld [vmem:[%s0 + $0x148] sm:$0xff]
  %v59 = vld [vmem:[%s1] sm:$0x1f]
  %vm60 = vcmask 39936
  %v62 = vsel %vm60, %v17, 0
  %v65 = vsel %vm60, %v18, 0
  %v68 = vsel %vm60, %v19, 0
  %v71 = vsel %vm60, %v20, 0
  %v74 = vsel %vm60, %v21, 0
  %v77 = vsel %vm60, %v22, 0
  %v80 = vsel %vm60, %v23, 0
  %v83 = vsel %vm60, %v24, 0
  %v86 = vsel %vm60, %v25, 0
  %v89 = vsel %vm60, %v26, 0
  %v92 = vsel %vm60, %v27, 0
  %v95 = vsel %vm60, %v28, 0
  %v98 = vsel %vm60, %v29, 0
  %v101 = vsel %vm60, %v30, 0
  %v104 = vsel %vm60, %v31, 0
  %v107 = vsel %vm60, %v32, 0
  %v110 = vsel %vm60, %v33, 0
  %v113 = vsel %vm60, %v34, 0
  %v116 = vsel %vm60, %v35, 0
  %v119 = vsel %vm60, %v36, 0
  %v122 = vsel %vm60, %v37, 0
  %v125 = vsel %vm60, %v38, 0
  %v128 = vsel %vm60, %v39, 0
  %v131 = vsel %vm60, %v40, 0
  %v134 = vsel %vm60, %v41, 0
  %v137 = vsel %vm60, %v42, 0
  %v140 = vsel %vm60, %v43, 0
  %v143 = vsel %vm60, %v44, 0
  %v146 = vsel %vm60, %v45, 0
  %v149 = vsel %vm60, %v46, 0
  %v152 = vsel %vm60, %v47, 0
  %v155 = vsel %vm60, %v48, 0
  %v158 = vsel %vm60, %v49, 0
  %v161 = vsel %vm60, %v50, 0
  %v164 = vsel %vm60, %v51, 0
  %v167 = vsel %vm60, %v52, 0
  %v170 = vsel %vm60, %v53, 0
  %v173 = vsel %vm60, %v54, 0
  %v176 = vsel %vm60, %v55, 0
  %v179 = vsel %vm60, %v56, 0
  %v182 = vsel %vm60, %v57, 0
  %v185 = vsel %vm60, %v58, 0
  %vm187 = vcmask 1044480
  %v189 = vsel %vm187, %v59, 0
  %191 = vmatprep.subr.mxu0 0.0
  %192 = vmatpush1.msra.mxu0 0.0
  %193 = vmatprep.subr.mxu0 0.0
  %194 = vmatpush1.msra.mxu0 0.0
  %195 = vmatprep.subr.mxu0 0.0
  %196 = vmatpush1.msra.mxu0 0.0
  %197 = vmatprep.subr.mxu0 0.0
  %198 = vmatpush1.msra.mxu0 0.0
  %199 = vmatprep.subr.mxu0 0.0
  %200 = vmatpush1.msra.mxu0 0.0
  %201 = vmatprep.subr.mxu0 0.0
  %202 = vmatpush1.msra.mxu0 0.0
  %203 = vmatprep.subr.mxu0 0.0
  %204 = vmatpush1.msra.mxu0 0.0
  %205 = vmatprep.subr.mxu0 0.0
  %206 = vmatpush1.msra.mxu0 0.0
  %207 = vmatprep.subr.mxu0 0.0
  %208 = vmatpush1.msra.mxu0 0.0
  %209 = vmatprep.subr.mxu0 0.0
  %210 = vmatpush1.msra.mxu0 0.0
  %211 = vmatprep.subr.mxu0 0.0
  %212 = vmatpush1.msra.mxu0 0.0
  %213 = vmatprep.subr.mxu0 0.0
  %214 = vmatpush1.msra.mxu0 0.0
  %215 = vmatprep.subr.mxu0 0.0
  %216 = vmatpush1.msra.mxu0 0.0
  %217 = vmatprep.subr.mxu0 0.0
  %218 = vmatpush1.msra.mxu0 0.0
  %219 = vmatprep.subr.mxu0 0.0
  %220 = vmatpush1.msra.mxu0 0.0
  %221 = vmatprep.subr.mxu0 0.0
  %222 = vmatpush1.msra.mxu0 %v189
  %223 = vmatprep.subr.mxu0 0.0
  %224 = vmatpush2.msra.mxu0 0.0
  %225 = vmatprep.subr.mxu0 0.0
  %226 = vmatpush2.msra.mxu0 0.0
  %227 = vmatprep.subr.mxu0 0.0
  %228 = vmatpush2.msra.mxu0 0.0
  %229 = vmatprep.subr.mxu0 0.0
  %230 = vmatpush2.msra.mxu0 0.0
  %231 = vmatprep.subr.mxu0 0.0
  %232 = vmatpush2.msra.mxu0 0.0
  %233 = vmatprep.subr.mxu0 0.0
  %234 = vmatpush2.msra.mxu0 0.0
  %235 = vmatprep.subr.mxu0 0.0
  %236 = vmatpush2.msra.mxu0 0.0
  %237 = vmatprep.subr.mxu0 0.0
  %238 = vmatpush2.msra.mxu0 0.0
  %239 = vmatprep.subr.mxu0 0.0
  %240 = vmatpush2.msra.mxu0 0.0
  %241 = vmatprep.subr.mxu0 0.0
  %242 = vmatpush2.msra.mxu0 0.0
  %243 = vmatprep.subr.mxu0 0.0
  %244 = vmatpush2.msra.mxu0 0.0
  %245 = vmatprep.subr.mxu0 0.0
  %246 = vmatpush2.msra.mxu0 0.0
  %247 = vmatprep.subr.mxu0 0.0
  %248 = vmatpush2.msra.mxu0 0.0
  %249 = vmatprep.subr.mxu0 0.0
  %250 = vmatpush2.msra.mxu0 0.0
  %251 = vmatprep.subr.mxu0 0.0
  %252 = vmatpush2.msra.mxu0 0.0
  %253 = vmatprep.subr.mxu0 0.0
  %254 = vmatpush2.msra.mxu0 0.0
  %255 = vmatprep.mubr.f32.mxu0 0.0
  %256 = vmatmul.mubr.f32.gmra.mxu0 %v62
  %v257 = vpop.f32.mrf.mxu0
  %v258 = vadd.f32 0.0, %v257
  %v259 = vpop.f32.mrf.mxu0
  %260 = vmatprep.mubr.f32.mxu0 0.0
  %261 = vmatmul.mubr.f32.gmra.mxu0 %v65
  %v262 = vpop.f32.mrf.mxu0
  %v263 = vadd.f32 0.0, %v262
  %v264 = vpop.f32.mrf.mxu0
  %265 = vmatprep.mubr.f32.mxu0 0.0
  %266 = vmatmul.mubr.f32.gmra.mxu0 %v68
  %v267 = vpop.f32.mrf.mxu0
  %v268 = vadd.f32 0.0, %v267
  %v269 = vpop.f32.mrf.mxu0
  %270 = vmatprep.mubr.f32.mxu0 0.0
  %271 = vmatmul.mubr.f32.gmra.mxu0 %v71
  %v272 = vpop.f32.mrf.mxu0
  %v273 = vadd.f32 0.0, %v272
  %v274 = vpop.f32.mrf.mxu0
  %275 = vmatprep.mubr.f32.mxu0 0.0
  %276 = vmatmul.mubr.f32.gmra.mxu0 %v74
  %v277 = vpop.f32.mrf.mxu0
  %v278 = vadd.f32 0.0, %v277
  %v279 = vpop.f32.mrf.mxu0
  %280 = vmatprep.mubr.f32.mxu0 0.0
  %281 = vmatmul.mubr.f32.gmra.mxu0 %v77
  %v282 = vpop.f32.mrf.mxu0
  %v283 = vadd.f32 0.0, %v282
  %v284 = vpop.f32.mrf.mxu0
  %285 = vmatprep.mubr.f32.mxu0 0.0
  %286 = vmatmul.mubr.f32.gmra.mxu0 %v80
  %v287 = vpop.f32.mrf.mxu0
  %v288 = vadd.f32 0.0, %v287
  %v289 = vpop.f32.mrf.mxu0
  %290 = vmatprep.mubr.f32.mxu0 0.0
  %291 = vmatmul.mubr.f32.gmra.mxu0 %v83
  %v292 = vpop.f32.mrf.mxu0
  %v293 = vadd.f32 0.0, %v292
  %v294 = vpop.f32.mrf.mxu0
  %295 = vmatprep.mubr.f32.mxu0 0.0
  %296 = vmatmul.mubr.f32.gmra.mxu0 %v86
  %v297 = vpop.f32.mrf.mxu0
  %v298 = vadd.f32 0.0, %v297
  %v299 = vpop.f32.mrf.mxu0
  %300 = vmatprep.mubr.f32.mxu0 0.0
  %301 = vmatmul.mubr.f32.gmra.mxu0 %v89
  %v302 = vpop.f32.mrf.mxu0
  %v303 = vadd.f32 0.0, %v302
  %v304 = vpop.f32.mrf.mxu0
  %305 = vmatprep.mubr.f32.mxu0 0.0
  %306 = vmatmul.mubr.f32.gmra.mxu0 %v92
  %v307 = vpop.f32.mrf.mxu0
  %v308 = vadd.f32 0.0, %v307
  %v309 = vpop.f32.mrf.mxu0
  %310 = vmatprep.mubr.f32.mxu0 0.0
  %311 = vmatmul.mubr.f32.gmra.mxu0 %v95
  %v312 = vpop.f32.mrf.mxu0
  %v313 = vadd.f32 0.0, %v312
  %v314 = vpop.f32.mrf.mxu0
  %315 = vmatprep.mubr.f32.mxu0 0.0
  %316 = vmatmul.mubr.f32.gmra.mxu0 %v98
  %v317 = vpop.f32.mrf.mxu0
  %v318 = vadd.f32 0.0, %v317
  %v319 = vpop.f32.mrf.mxu0
  %320 = vmatprep.mubr.f32.mxu0 0.0
  %321 = vmatmul.mubr.f32.gmra.mxu0 %v101
  %v322 = vpop.f32.mrf.mxu0
  %v323 = vadd.f32 0.0, %v322
  %v324 = vpop.f32.mrf.mxu0
  %325 = vmatprep.mubr.f32.mxu0 0.0
  %326 = vmatmul.mubr.f32.gmra.mxu0 %v104
  %v327 = vpop.f32.mrf.mxu0
  %v328 = vadd.f32 0.0, %v327
  %v329 = vpop.f32.mrf.mxu0
  %330 = vmatprep.mubr.f32.mxu0 0.0
  %331 = vmatmul.mubr.f32.gmra.mxu0 %v107
  %v332 = vpop.f32.mrf.mxu0
  %v333 = vadd.f32 0.0, %v332
  %v334 = vpop.f32.mrf.mxu0
  %335 = vmatprep.mubr.f32.mxu0 0.0
  %336 = vmatmul.mubr.f32.gmra.mxu0 %v110
  %v337 = vpop.f32.mrf.mxu0
  %v338 = vadd.f32 0.0, %v337
  %v339 = vpop.f32.mrf.mxu0
  %340 = vmatprep.mubr.f32.mxu0 0.0
  %341 = vmatmul.mubr.f32.gmra.mxu0 %v113
  %v342 = vpop.f32.mrf.mxu0
  %v343 = vadd.f32 0.0, %v342
  %v344 = vpop.f32.mrf.mxu0
  %345 = vmatprep.mubr.f32.mxu0 0.0
  %346 = vmatmul.mubr.f32.gmra.mxu0 %v116
  %v347 = vpop.f32.mrf.mxu0
  %v348 = vadd.f32 0.0, %v347
  %v349 = vpop.f32.mrf.mxu0
  %350 = vmatprep.mubr.f32.mxu0 0.0
  %351 = vmatmul.mubr.f32.gmra.mxu0 %v119
  %v352 = vpop.f32.mrf.mxu0
  %v353 = vadd.f32 0.0, %v352
  %v354 = vpop.f32.mrf.mxu0
  %355 = vmatprep.mubr.f32.mxu0 0.0
  %356 = vmatmul.mubr.f32.gmra.mxu0 %v122
  %v357 = vpop.f32.mrf.mxu0
  %v358 = vadd.f32 0.0, %v357
  %v359 = vpop.f32.mrf.mxu0
  %360 = vmatprep.mubr.f32.mxu0 0.0
  %361 = vmatmul.mubr.f32.gmra.mxu0 %v125
  %v362 = vpop.f32.mrf.mxu0
  %v363 = vadd.f32 0.0, %v362
  %v364 = vpop.f32.mrf.mxu0
  %365 = vmatprep.mubr.f32.mxu0 0.0
  %366 = vmatmul.mubr.f32.gmra.mxu0 %v128
  %v367 = vpop.f32.mrf.mxu0
  %v368 = vadd.f32 0.0, %v367
  %v369 = vpop.f32.mrf.mxu0
  %370 = vmatprep.mubr.f32.mxu0 0.0
  %371 = vmatmul.mubr.f32.gmra.mxu0 %v131
  %v372 = vpop.f32.mrf.mxu0
  %v373 = vadd.f32 0.0, %v372
  %v374 = vpop.f32.mrf.mxu0
  %375 = vmatprep.mubr.f32.mxu0 0.0
  %376 = vmatmul.mubr.f32.gmra.mxu0 %v134
  %v377 = vpop.f32.mrf.mxu0
  %v378 = vadd.f32 0.0, %v377
  %v379 = vpop.f32.mrf.mxu0
  %380 = vmatprep.mubr.f32.mxu0 0.0
  %381 = vmatmul.mubr.f32.gmra.mxu0 %v137
  %v382 = vpop.f32.mrf.mxu0
  %v383 = vadd.f32 0.0, %v382
  %v384 = vpop.f32.mrf.mxu0
  %385 = vmatprep.mubr.f32.mxu0 0.0
  %386 = vmatmul.mubr.f32.gmra.mxu0 %v140
  %v387 = vpop.f32.mrf.mxu0
  %v388 = vadd.f32 0.0, %v387
  %v389 = vpop.f32.mrf.mxu0
  %390 = vmatprep.mubr.f32.mxu0 0.0
  %391 = vmatmul.mubr.f32.gmra.mxu0 %v143
  %v392 = vpop.f32.mrf.mxu0
  %v393 = vadd.f32 0.0, %v392
  %v394 = vpop.f32.mrf.mxu0
  %395 = vmatprep.mubr.f32.mxu0 0.0
  %396 = vmatmul.mubr.f32.gmra.mxu0 %v146
  %v397 = vpop.f32.mrf.mxu0
  %v398 = vadd.f32 0.0, %v397
  %v399 = vpop.f32.mrf.mxu0
  %400 = vmatprep.mubr.f32.mxu0 0.0
  %401 = vmatmul.mubr.f32.gmra.mxu0 %v149
  %v402 = vpop.f32.mrf.mxu0
  %v403 = vadd.f32 0.0, %v402
  %v404 = vpop.f32.mrf.mxu0
  %405 = vmatprep.mubr.f32.mxu0 0.0
  %406 = vmatmul.mubr.f32.gmra.mxu0 %v152
  %v407 = vpop.f32.mrf.mxu0
  %v408 = vadd.f32 0.0, %v407
  %v409 = vpop.f32.mrf.mxu0
  %410 = vmatprep.mubr.f32.mxu0 0.0
  %411 = vmatmul.mubr.f32.gmra.mxu0 %v155
  %v412 = vpop.f32.mrf.mxu0
  %v413 = vadd.f32 0.0, %v412
  %v414 = vpop.f32.mrf.mxu0
  %415 = vmatprep.mubr.f32.mxu0 0.0
  %416 = vmatmul.mubr.f32.gmra.mxu0 %v158
  %v417 = vpop.f32.mrf.mxu0
  %v418 = vadd.f32 0.0, %v417
  %v419 = vpop.f32.mrf.mxu0
  %420 = vmatprep.mubr.f32.mxu0 0.0
  %421 = vmatmul.mubr.f32.gmra.mxu0 %v161
  %v422 = vpop.f32.mrf.mxu0
  %v423 = vadd.f32 0.0, %v422
  %v424 = vpop.f32.mrf.mxu0
  %425 = vmatprep.mubr.f32.mxu0 0.0
  %426 = vmatmul.mubr.f32.gmra.mxu0 %v164
  %v427 = vpop.f32.mrf.mxu0
  %v428 = vadd.f32 0.0, %v427
  %v429 = vpop.f32.mrf.mxu0
  %430 = vmatprep.mubr.f32.mxu0 0.0
  %431 = vmatmul.mubr.f32.gmra.mxu0 %v167
  %v432 = vpop.f32.mrf.mxu0
  %v433 = vadd.f32 0.0, %v432
  %v434 = vpop.f32.mrf.mxu0
  %435 = vmatprep.mubr.f32.mxu0 0.0
  %436 = vmatmul.mubr.f32.gmra.mxu0 %v170
  %v437 = vpop.f32.mrf.mxu0
  %v438 = vadd.f32 0.0, %v437
  %v439 = vpop.f32.mrf.mxu0
  %440 = vmatprep.mubr.f32.mxu0 0.0
  %441 = vmatmul.mubr.f32.gmra.mxu0 %v173
  %v442 = vpop.f32.mrf.mxu0
  %v443 = vadd.f32 0.0, %v442
  %v444 = vpop.f32.mrf.mxu0
  %445 = vmatprep.mubr.f32.mxu0 0.0
  %446 = vmatmul.mubr.f32.gmra.mxu0 %v176
  %v447 = vpop.f32.mrf.mxu0
  %v448 = vadd.f32 0.0, %v447
  %v449 = vpop.f32.mrf.mxu0
  %450 = vmatprep.mubr.f32.mxu0 0.0
  %451 = vmatmul.mubr.f32.gmra.mxu0 %v179
  %v452 = vpop.f32.mrf.mxu0
  %v453 = vadd.f32 0.0, %v452
  %v454 = vpop.f32.mrf.mxu0
  %455 = vmatprep.mubr.f32.mxu0 0.0
  %456 = vmatmul.mubr.f32.gmra.mxu0 %v182
  %v457 = vpop.f32.mrf.mxu0
  %v458 = vadd.f32 0.0, %v457
  %v459 = vpop.f32.mrf.mxu0
  %460 = vmatprep.mubr.f32.mxu0 0.0
  %461 = vmatmul.mubr.f32.gmra.mxu0 %v185
  %v462 = vpop.f32.mrf.mxu0
  %v463 = vpop.f32.mrf.mxu0
  %464 = vdwg.mxu0
  %vm506 = vcmask 1046528
  %v507 = vrot.slane %v258, 1
  %v508 = vrot.slane %v263, 1
  %v509 = vsel %vm506, %v507, %v508
  %v510 = vrot.slane %v268, 1
  %v511 = vsel %vm506, %v508, %v510
  %v512 = vrot.slane %v273, 1
  %v513 = vsel %vm506, %v510, %v512
  %v514 = vrot.slane %v278, 1
  %v515 = vsel %vm506, %v512, %v514
  %v516 = vrot.slane %v283, 1
  %v517 = vsel %vm506, %v514, %v516
  %v518 = vrot.slane %v288, 1
  %v519 = vsel %vm506, %v516, %v518
  %v520 = vrot.slane %v293, 1
  %v521 = vsel %vm506, %v518, %v520
  %v522 = vrot.slane %v298, 1
  %v523 = vsel %vm506, %v520, %v522
  %v524 = vrot.slane %v303, 1
  %v525 = vsel %vm506, %v522, %v524
  %v526 = vrot.slane %v308, 1
  %v527 = vsel %vm506, %v524, %v526
  %v528 = vrot.slane %v313, 1
  %v529 = vsel %vm506, %v526, %v528
  %v530 = vrot.slane %v318, 1
  %v531 = vsel %vm506, %v528, %v530
  %v532 = vrot.slane %v323, 1
  %v533 = vsel %vm506, %v530, %v532
  %v534 = vrot.slane %v328, 1
  %v535 = vsel %vm506, %v532, %v534
  %v536 = vrot.slane %v333, 1
  %v537 = vsel %vm506, %v534, %v536
  %v538 = vrot.slane %v338, 1
  %v539 = vsel %vm506, %v536, %v538
  %v540 = vrot.slane %v343, 1
  %v541 = vsel %vm506, %v538, %v540
  %v542 = vrot.slane %v348, 1
  %v543 = vsel %vm506, %v540, %v542
  %v544 = vrot.slane %v353, 1
  %v545 = vsel %vm506, %v542, %v544
  %v546 = vrot.slane %v358, 1
  %v547 = vsel %vm506, %v544, %v546
  %v548 = vrot.slane %v363, 1
  %v549 = vsel %vm506, %v546, %v548
  %v550 = vrot.slane %v368, 1
  %v551 = vsel %vm506, %v548, %v550
  %v552 = vrot.slane %v373, 1
  %v553 = vsel %vm506, %v550, %v552
  %v554 = vrot.slane %v378, 1
  %v555 = vsel %vm506, %v552, %v554
  %v556 = vrot.slane %v383, 1
  %v557 = vsel %vm506, %v554, %v556
  %v558 = vrot.slane %v388, 1
  %v559 = vsel %vm506, %v556, %v558
  %v560 = vrot.slane %v393, 1
  %v561 = vsel %vm506, %v558, %v560
  %v562 = vrot.slane %v398, 1
  %v563 = vsel %vm506, %v560, %v562
  %v564 = vrot.slane %v403, 1
  %v565 = vsel %vm506, %v562, %v564
  %v566 = vrot.slane %v408, 1
  %v567 = vsel %vm506, %v564, %v566
  %v568 = vrot.slane %v413, 1
  %v569 = vsel %vm506, %v566, %v568
  %v570 = vrot.slane %v418, 1
  %v571 = vsel %vm506, %v568, %v570
  %v572 = vrot.slane %v423, 1
  %v573 = vsel %vm506, %v570, %v572
  %v574 = vrot.slane %v428, 1
  %v575 = vsel %vm506, %v572, %v574
  %v576 = vrot.slane %v433, 1
  %v577 = vsel %vm506, %v574, %v576
  %v578 = vrot.slane %v438, 1
  %v579 = vsel %vm506, %v576, %v578
  %v580 = vrot.slane %v443, 1
  %v581 = vsel %vm506, %v578, %v580
  %v582 = vrot.slane %v448, 1
  %v583 = vsel %vm506, %v580, %v582
  %v584 = vrot.slane %v453, 1
  %v585 = vsel %vm506, %v582, %v584
  %v586 = vrot.slane %v458, 1
  %v587 = vsel %vm506, %v584, %v586
  %588 = vrot.lane.b32.xlu0 %v509, 8
  %v589 = vpop.permute.xlu0 %588
  %590 = vrot.lane.b32.xlu0 %v511, 8
  %v591 = vpop.permute.xlu0 %590
  %592 = vrot.lane.b32.xlu0 %v513, 8
  %v593 = vpop.permute.xlu0 %592
  %594 = vrot.lane.b32.xlu0 %v515, 8
  %v595 = vpop.permute.xlu0 %594
  %596 = vrot.lane.b32.xlu0 %v517, 8
  %v597 = vpop.permute.xlu0 %596
  %598 = vrot.lane.b32.xlu0 %v519, 8
  %v599 = vpop.permute.xlu0 %598
  %600 = vrot.lane.b32.xlu0 %v521, 8
  %v601 = vpop.permute.xlu0 %600
  %602 = vrot.lane.b32.xlu0 %v523, 8
  %v603 = vpop.permute.xlu0 %602
  %604 = vrot.lane.b32.xlu0 %v525, 8
  %v605 = vpop.permute.xlu0 %604
  %606 = vrot.lane.b32.xlu0 %v527, 8
  %v607 = vpop.permute.xlu0 %606
  %608 = vrot.lane.b32.xlu0 %v529, 8
  %v609 = vpop.permute.xlu0 %608
  %610 = vrot.lane.b32.xlu0 %v531, 8
  %v611 = vpop.permute.xlu0 %610
  %612 = vrot.lane.b32.xlu0 %v533, 8
  %v613 = vpop.permute.xlu0 %612
  %614 = vrot.lane.b32.xlu0 %v535, 8
  %v615 = vpop.permute.xlu0 %614
  %616 = vrot.lane.b32.xlu0 %v537, 8
  %v617 = vpop.permute.xlu0 %616
  %618 = vrot.lane.b32.xlu0 %v539, 8
  %v619 = vpop.permute.xlu0 %618
  %620 = vrot.lane.b32.xlu0 %v541, 8
  %v621 = vpop.permute.xlu0 %620
  %622 = vrot.lane.b32.xlu0 %v543, 8
  %v623 = vpop.permute.xlu0 %622
  %624 = vrot.lane.b32.xlu0 %v545, 8
  %v625 = vpop.permute.xlu0 %624
  %626 = vrot.lane.b32.xlu0 %v547, 8
  %v627 = vpop.permute.xlu0 %626
  %628 = vrot.lane.b32.xlu0 %v549, 8
  %v629 = vpop.permute.xlu0 %628
  %630 = vrot.lane.b32.xlu0 %v551, 8
  %v631 = vpop.permute.xlu0 %630
  %632 = vrot.lane.b32.xlu0 %v553, 8
  %v633 = vpop.permute.xlu0 %632
  %634 = vrot.lane.b32.xlu0 %v555, 8
  %v635 = vpop.permute.xlu0 %634
  %636 = vrot.lane.b32.xlu0 %v557, 8
  %v637 = vpop.permute.xlu0 %636
  %638 = vrot.lane.b32.xlu0 %v559, 8
  %v639 = vpop.permute.xlu0 %638
  %640 = vrot.lane.b32.xlu0 %v561, 8
  %v641 = vpop.permute.xlu0 %640
  %642 = vrot.lane.b32.xlu0 %v563, 8
  %v643 = vpop.permute.xlu0 %642
  %644 = vrot.lane.b32.xlu0 %v565, 8
  %v645 = vpop.permute.xlu0 %644
  %646 = vrot.lane.b32.xlu0 %v567, 8
  %v647 = vpop.permute.xlu0 %646
  %648 = vrot.lane.b32.xlu0 %v569, 8
  %v649 = vpop.permute.xlu0 %648
  %650 = vrot.lane.b32.xlu0 %v571, 8
  %v651 = vpop.permute.xlu0 %650
  %652 = vrot.lane.b32.xlu0 %v573, 8
  %v653 = vpop.permute.xlu0 %652
  %654 = vrot.lane.b32.xlu0 %v575, 8
  %v655 = vpop.permute.xlu0 %654
  %656 = vrot.lane.b32.xlu0 %v577, 8
  %v657 = vpop.permute.xlu0 %656
  %658 = vrot.lane.b32.xlu0 %v579, 8
  %v659 = vpop.permute.xlu0 %658
  %660 = vrot.lane.b32.xlu0 %v581, 8
  %v661 = vpop.permute.xlu0 %660
  %662 = vrot.lane.b32.xlu0 %v583, 8
  %v663 = vpop.permute.xlu0 %662
  %664 = vrot.lane.b32.xlu0 %v585, 8
  %v665 = vpop.permute.xlu0 %664
  %666 = vrot.lane.b32.xlu0 %v587, 8
  %v667 = vpop.permute.xlu0 %666
  %vm708 = vcmask 1045504
  %v709 = vrot.slane %v258, 2
  %v710 = vrot.slane %v263, 2
  %v711 = vsel %vm708, %v709, %v710
  %v712 = vrot.slane %v268, 2
  %v713 = vsel %vm708, %v710, %v712
  %v714 = vrot.slane %v273, 2
  %v715 = vsel %vm708, %v712, %v714
  %v716 = vrot.slane %v278, 2
  %v717 = vsel %vm708, %v714, %v716
  %v718 = vrot.slane %v283, 2
  %v719 = vsel %vm708, %v716, %v718
  %v720 = vrot.slane %v288, 2
  %v721 = vsel %vm708, %v718, %v720
  %v722 = vrot.slane %v293, 2
  %v723 = vsel %vm708, %v720, %v722
  %v724 = vrot.slane %v298, 2
  %v725 = vsel %vm708, %v722, %v724
  %v726 = vrot.slane %v303, 2
  %v727 = vsel %vm708, %v724, %v726
  %v728 = vrot.slane %v308, 2
  %v729 = vsel %vm708, %v726, %v728
  %v730 = vrot.slane %v313, 2
  %v731 = vsel %vm708, %v728, %v730
  %v732 = vrot.slane %v318, 2
  %v733 = vsel %vm708, %v730, %v732
  %v734 = vrot.slane %v323, 2
  %v735 = vsel %vm708, %v732, %v734
  %v736 = vrot.slane %v328, 2
  %v737 = vsel %vm708, %v734, %v736
  %v738 = vrot.slane %v333, 2
  %v739 = vsel %vm708, %v736, %v738
  %v740 = vrot.slane %v338, 2
  %v741 = vsel %vm708, %v738, %v740
  %v742 = vrot.slane %v343, 2
  %v743 = vsel %vm708, %v740, %v742
  %v744 = vrot.slane %v348, 2
  %v745 = vsel %vm708, %v742, %v744
  %v746 = vrot.slane %v353, 2
  %v747 = vsel %vm708, %v744, %v746
  %v748 = vrot.slane %v358, 2
  %v749 = vsel %vm708, %v746, %v748
  %v750 = vrot.slane %v363, 2
  %v751 = vsel %vm708, %v748, %v750
  %v752 = vrot.slane %v368, 2
  %v753 = vsel %vm708, %v750, %v752
  %v754 = vrot.slane %v373, 2
  %v755 = vsel %vm708, %v752, %v754
  %v756 = vrot.slane %v378, 2
  %v757 = vsel %vm708, %v754, %v756
  %v758 = vrot.slane %v383, 2
  %v759 = vsel %vm708, %v756, %v758
  %v760 = vrot.slane %v388, 2
  %v761 = vsel %vm708, %v758, %v760
  %v762 = vrot.slane %v393, 2
  %v763 = vsel %vm708, %v760, %v762
  %v764 = vrot.slane %v398, 2
  %v765 = vsel %vm708, %v762, %v764
  %v766 = vrot.slane %v403, 2
  %v767 = vsel %vm708, %v764, %v766
  %v768 = vrot.slane %v408, 2
  %v769 = vsel %vm708, %v766, %v768
  %v770 = vrot.slane %v413, 2
  %v771 = vsel %vm708, %v768, %v770
  %v772 = vrot.slane %v418, 2
  %v773 = vsel %vm708, %v770, %v772
  %v774 = vrot.slane %v423, 2
  %v775 = vsel %vm708, %v772, %v774
  %v776 = vrot.slane %v428, 2
  %v777 = vsel %vm708, %v774, %v776
  %v778 = vrot.slane %v433, 2
  %v779 = vsel %vm708, %v776, %v778
  %v780 = vrot.slane %v438, 2
  %v781 = vsel %vm708, %v778, %v780
  %v782 = vrot.slane %v443, 2
  %v783 = vsel %vm708, %v780, %v782
  %v784 = vrot.slane %v448, 2
  %v785 = vsel %vm708, %v782, %v784
  %v786 = vrot.slane %v453, 2
  %v787 = vsel %vm708, %v784, %v786
  %v788 = vrot.slane %v458, 2
  %v789 = vsel %vm708, %v786, %v788
  %790 = vrot.lane.b32.xlu0 %v711, 16
  %v791 = vpop.permute.xlu0 %790
  %792 = vrot.lane.b32.xlu0 %v713, 16
  %v793 = vpop.permute.xlu0 %792
  %794 = vrot.lane.b32.xlu0 %v715, 16
  %v795 = vpop.permute.xlu0 %794
  %796 = vrot.lane.b32.xlu0 %v717, 16
  %v797 = vpop.permute.xlu0 %796
  %798 = vrot.lane.b32.xlu0 %v719, 16
  %v799 = vpop.permute.xlu0 %798
  %800 = vrot.lane.b32.xlu0 %v721, 16
  %v801 = vpop.permute.xlu0 %800
  %802 = vrot.lane.b32.xlu0 %v723, 16
  %v803 = vpop.permute.xlu0 %802
  %804 = vrot.lane.b32.xlu0 %v725, 16
  %v805 = vpop.permute.xlu0 %804
  %806 = vrot.lane.b32.xlu0 %v727, 16
  %v807 = vpop.permute.xlu0 %806
  %808 = vrot.lane.b32.xlu0 %v729, 16
  %v809 = vpop.permute.xlu0 %808
  %810 = vrot.lane.b32.xlu0 %v731, 16
  %v811 = vpop.permute.xlu0 %810
  %812 = vrot.lane.b32.xlu0 %v733, 16
  %v813 = vpop.permute.xlu0 %812
  %814 = vrot.lane.b32.xlu0 %v735, 16
  %v815 = vpop.permute.xlu0 %814
  %816 = vrot.lane.b32.xlu0 %v737, 16
  %v817 = vpop.permute.xlu0 %816
  %818 = vrot.lane.b32.xlu0 %v739, 16
  %v819 = vpop.permute.xlu0 %818
  %820 = vrot.lane.b32.xlu0 %v741, 16
  %v821 = vpop.permute.xlu0 %820
  %822 = vrot.lane.b32.xlu0 %v743, 16
  %v823 = vpop.permute.xlu0 %822
  %824 = vrot.lane.b32.xlu0 %v745, 16
  %v825 = vpop.permute.xlu0 %824
  %826 = vrot.lane.b32.xlu0 %v747, 16
  %v827 = vpop.permute.xlu0 %826
  %828 = vrot.lane.b32.xlu0 %v749, 16
  %v829 = vpop.permute.xlu0 %828
  %830 = vrot.lane.b32.xlu0 %v751, 16
  %v831 = vpop.permute.xlu0 %830
  %832 = vrot.lane.b32.xlu0 %v753, 16
  %v833 = vpop.permute.xlu0 %832
  %834 = vrot.lane.b32.xlu0 %v755, 16
  %v835 = vpop.permute.xlu0 %834
  %836 = vrot.lane.b32.xlu0 %v757, 16
  %v837 = vpop.permute.xlu0 %836
  %838 = vrot.lane.b32.xlu0 %v759, 16
  %v839 = vpop.permute.xlu0 %838
  %840 = vrot.lane.b32.xlu0 %v761, 16
  %v841 = vpop.permute.xlu0 %840
  %842 = vrot.lane.b32.xlu0 %v763, 16
  %v843 = vpop.permute.xlu0 %842
  %844 = vrot.lane.b32.xlu0 %v765, 16
  %v845 = vpop.permute.xlu0 %844
  %846 = vrot.lane.b32.xlu0 %v767, 16
  %v847 = vpop.permute.xlu0 %846
  %848 = vrot.lane.b32.xlu0 %v769, 16
  %v849 = vpop.permute.xlu0 %848
  %850 = vrot.lane.b32.xlu0 %v771, 16
  %v851 = vpop.permute.xlu0 %850
  %852 = vrot.lane.b32.xlu0 %v773, 16
  %v853 = vpop.permute.xlu0 %852
  %854 = vrot.lane.b32.xlu0 %v775, 16
  %v855 = vpop.permute.xlu0 %854
  %856 = vrot.lane.b32.xlu0 %v777, 16
  %v857 = vpop.permute.xlu0 %856
  %858 = vrot.lane.b32.xlu0 %v779, 16
  %v859 = vpop.permute.xlu0 %858
  %860 = vrot.lane.b32.xlu0 %v781, 16
  %v861 = vpop.permute.xlu0 %860
  %862 = vrot.lane.b32.xlu0 %v783, 16
  %v863 = vpop.permute.xlu0 %862
  %864 = vrot.lane.b32.xlu0 %v785, 16
  %v865 = vpop.permute.xlu0 %864
  %866 = vrot.lane.b32.xlu0 %v787, 16
  %v867 = vpop.permute.xlu0 %866
  %868 = vrot.lane.b32.xlu0 %v789, 16
  %v869 = vpop.permute.xlu0 %868
  %vm910 = vcmask 64512
  %v911 = vsel %vm910, %v258, %v589
  %v912 = vsel %vm910, %v263, %v591
  %v913 = vsel %vm910, %v268, %v593
  %v914 = vsel %vm910, %v273, %v595
  %v915 = vsel %vm910, %v278, %v597
  %v916 = vsel %vm910, %v283, %v599
  %v917 = vsel %vm910, %v288, %v601
  %v918 = vsel %vm910, %v293, %v603
  %v919 = vsel %vm910, %v298, %v605
  %v920 = vsel %vm910, %v303, %v607
  %v921 = vsel %vm910, %v308, %v609
  %v922 = vsel %vm910, %v313, %v611
  %v923 = vsel %vm910, %v318, %v613
  %v924 = vsel %vm910, %v323, %v615
  %v925 = vsel %vm910, %v328, %v617
  %v926 = vsel %vm910, %v333, %v619
  %v927 = vsel %vm910, %v338, %v621
  %v928 = vsel %vm910, %v343, %v623
  %v929 = vsel %vm910, %v348, %v625
  %v930 = vsel %vm910, %v353, %v627
  %v931 = vsel %vm910, %v358, %v629
  %v932 = vsel %vm910, %v363, %v631
  %v933 = vsel %vm910, %v368, %v633
  %v934 = vsel %vm910, %v373, %v635
  %v935 = vsel %vm910, %v378, %v637
  %v936 = vsel %vm910, %v383, %v639
  %v937 = vsel %vm910, %v388, %v641
  %v938 = vsel %vm910, %v393, %v643
  %v939 = vsel %vm910, %v398, %v645
  %v940 = vsel %vm910, %v403, %v647
  %v941 = vsel %vm910, %v408, %v649
  %v942 = vsel %vm910, %v413, %v651
  %v943 = vsel %vm910, %v418, %v653
  %v944 = vsel %vm910, %v423, %v655
  %v945 = vsel %vm910, %v428, %v657
  %v946 = vsel %vm910, %v433, %v659
  %v947 = vsel %vm910, %v438, %v661
  %v948 = vsel %vm910, %v443, %v663
  %v949 = vsel %vm910, %v448, %v665
  %v950 = vsel %vm910, %v453, %v667
  %vm951 = vcmask 130048
  %v952 = vsel %vm951, %v911, %v791
  %v953 = vsel %vm951, %v912, %v793
  %v954 = vsel %vm951, %v913, %v795
  %v955 = vsel %vm951, %v914, %v797
  %v956 = vsel %vm951, %v915, %v799
  %v957 = vsel %vm951, %v916, %v801
  %v958 = vsel %vm951, %v917, %v803
  %v959 = vsel %vm951, %v918, %v805
  %v960 = vsel %vm951, %v919, %v807
  %v961 = vsel %vm951, %v920, %v809
  %v962 = vsel %vm951, %v921, %v811
  %v963 = vsel %vm951, %v922, %v813
  %v964 = vsel %vm951, %v923, %v815
  %v965 = vsel %vm951, %v924, %v817
  %v966 = vsel %vm951, %v925, %v819
  %v967 = vsel %vm951, %v926, %v821
  %v968 = vsel %vm951, %v927, %v823
  %v969 = vsel %vm951, %v928, %v825
  %v970 = vsel %vm951, %v929, %v827
  %v971 = vsel %vm951, %v930, %v829
  %v972 = vsel %vm951, %v931, %v831
  %v973 = vsel %vm951, %v932, %v833
  %v974 = vsel %vm951, %v933, %v835
  %v975 = vsel %vm951, %v934, %v837
  %v976 = vsel %vm951, %v935, %v839
  %v977 = vsel %vm951, %v936, %v841
  %v978 = vsel %vm951, %v937, %v843
  %v979 = vsel %vm951, %v938, %v845
  %v980 = vsel %vm951, %v939, %v847
  %v981 = vsel %vm951, %v940, %v849
  %v982 = vsel %vm951, %v941, %v851
  %v983 = vsel %vm951, %v942, %v853
  %v984 = vsel %vm951, %v943, %v855
  %v985 = vsel %vm951, %v944, %v857
  %v986 = vsel %vm951, %v945, %v859
  %v987 = vsel %vm951, %v946, %v861
  %v988 = vsel %vm951, %v947, %v863
  %v989 = vsel %vm951, %v948, %v865
  %v990 = vsel %vm951, %v949, %v867
  %v991 = vsel %vm951, %v950, %v869
  %v992 = vld [vmem:[%s2] sm:$0xff]
  %v993 = vld [vmem:[%s2 + $0x8] sm:$0xff]
  %v994 = vld [vmem:[%s2 + $0x10] sm:$0xff]
  %s995 = scalar_lea.vmem %s2, 24
  %v996 = vld [vmem:[%s995] sm:$0xff]
  %v997 = vld [vmem:[%s995 + $0x8] sm:$0xff]
  %v998 = vld [vmem:[%s995 + $0x10] sm:$0xff]
  %vm999 = vcmask 195584
  %v1001 = vsel %vm999, %v954, 0
  %v1004 = vsel %vm999, %v955, 0
  %v1007 = vsel %vm999, %v956, 0
  %v1010 = vsel %vm999, %v957, 0
  %v1013 = vsel %vm999, %v958, 0
  %v1016 = vsel %vm999, %v959, 0
  %v1019 = vsel %vm999, %v960, 0
  %v1022 = vsel %vm999, %v961, 0
  %v1025 = vsel %vm999, %v962, 0
  %v1028 = vsel %vm999, %v963, 0
  %v1031 = vsel %vm999, %v964, 0
  %v1034 = vsel %vm999, %v965, 0
  %v1037 = vsel %vm999, %v966, 0
  %v1040 = vsel %vm999, %v967, 0
  %v1043 = vsel %vm999, %v968, 0
  %v1046 = vsel %vm999, %v969, 0
  %v1049 = vsel %vm999, %v970, 0
  %v1052 = vsel %vm999, %v971, 0
  %v1055 = vsel %vm999, %v972, 0
  %v1058 = vsel %vm999, %v973, 0
  %v1061 = vsel %vm999, %v974, 0
  %v1064 = vsel %vm999, %v975, 0
  %v1067 = vsel %vm999, %v976, 0
  %v1070 = vsel %vm999, %v977, 0
  %v1073 = vsel %vm999, %v978, 0
  %v1076 = vsel %vm999, %v979, 0
  %v1079 = vsel %vm999, %v980, 0
  %v1082 = vsel %vm999, %v981, 0
  %v1085 = vsel %vm999, %v982, 0
  %v1088 = vsel %vm999, %v983, 0
  %v1091 = vsel %vm999, %v984, 0
  %v1094 = vsel %vm999, %v985, 0
  %v1097 = vsel %vm999, %v986, 0
  %v1100 = vsel %vm999, %v987, 0
  %v1103 = vsel %vm999, %v988, 0
  %v1106 = vsel %vm999, %v989, 0
  %1108 = vmatprep.subr.mxu0 0.0
  %1109 = vmatpush1.msra.mxu0 0.0
  %1110 = vmatprep.subr.mxu0 0.0
  %1111 = vmatpush1.msra.mxu0 0.0
  %1112 = vmatprep.subr.mxu0 0.0
  %1113 = vmatpush1.msra.mxu0 0.0
  %1114 = vmatprep.subr.mxu0 0.0
  %1115 = vmatpush1.msra.mxu0 0.0
  %1116 = vmatprep.subr.mxu0 0.0
  %1117 = vmatpush1.msra.mxu0 0.0
  %1118 = vmatprep.subr.mxu0 0.0
  %1119 = vmatpush1.msra.mxu0 0.0
  %1120 = vmatprep.subr.mxu0 0.0
  %1121 = vmatpush1.msra.mxu0 0.0
  %1122 = vmatprep.subr.mxu0 0.0
  %1123 = vmatpush1.msra.mxu0 0.0
  %1124 = vmatprep.subr.mxu0 0.0
  %1125 = vmatpush1.msra.mxu0 0.0
  %1126 = vmatprep.subr.mxu0 0.0
  %1127 = vmatpush1.msra.mxu0 0.0
  %1128 = vmatprep.subr.mxu0 0.0
  %1129 = vmatpush1.msra.mxu0 0.0
  %1130 = vmatprep.subr.mxu0 0.0
  %1131 = vmatpush1.msra.mxu0 0.0
  %1132 = vmatprep.subr.mxu0 0.0
  %1133 = vmatpush1.msra.mxu0 0.0
  %1134 = vmatprep.subr.mxu0 0.0
  %1135 = vmatpush1.msra.mxu0 %v998
  %1136 = vmatprep.subr.mxu0 0.0
  %1137 = vmatpush1.msra.mxu0 %v997
  %1138 = vmatprep.subr.mxu0 0.0
  %1139 = vmatpush1.msra.mxu0 %v996
  %1140 = vmatprep.subr.mxu0 0.0
  %1141 = vmatpush2.msra.mxu0 0.0
  %1142 = vmatprep.subr.mxu0 0.0
  %1143 = vmatpush2.msra.mxu0 0.0
  %1144 = vmatprep.subr.mxu0 0.0
  %1145 = vmatpush2.msra.mxu0 0.0
  %1146 = vmatprep.subr.mxu0 0.0
  %1147 = vmatpush2.msra.mxu0 0.0
  %1148 = vmatprep.subr.mxu0 0.0
  %1149 = vmatpush2.msra.mxu0 0.0
  %1150 = vmatprep.subr.mxu0 0.0
  %1151 = vmatpush2.msra.mxu0 0.0
  %1152 = vmatprep.subr.mxu0 0.0
  %1153 = vmatpush2.msra.mxu0 0.0
  %1154 = vmatprep.subr.mxu0 0.0
  %1155 = vmatpush2.msra.mxu0 0.0
  %1156 = vmatprep.subr.mxu0 0.0
  %1157 = vmatpush2.msra.mxu0 0.0
  %1158 = vmatprep.subr.mxu0 0.0
  %1159 = vmatpush2.msra.mxu0 0.0
  %1160 = vmatprep.subr.mxu0 0.0
  %1161 = vmatpush2.msra.mxu0 0.0
  %1162 = vmatprep.subr.mxu0 0.0
  %1163 = vmatpush2.msra.mxu0 0.0
  %1164 = vmatprep.subr.mxu0 0.0
  %1165 = vmatpush2.msra.mxu0 0.0
  %1166 = vmatprep.subr.mxu0 0.0
  %1167 = vmatpush2.msra.mxu0 0.0
  %1168 = vmatprep.subr.mxu0 0.0
  %1169 = vmatpush2.msra.mxu0 0.0
  %1170 = vmatprep.subr.mxu0 0.0
  %1171 = vmatpush2.msra.mxu0 0.0
  %1172 = vmatprep.mubr.f32.mxu0 0.0
  %1173 = vmatmul.mubr.f32.gmra.mxu0 %v1001
  %v1174 = vpop.f32.mrf.mxu0
  %v1175 = vadd.f32 0.0, %v1174
  %v1176 = vpop.f32.mrf.mxu0
  %1177 = vmatprep.mubr.f32.mxu0 0.0
  %1178 = vmatmul.mubr.f32.gmra.mxu0 %v1004
  %v1179 = vpop.f32.mrf.mxu0
  %v1180 = vadd.f32 0.0, %v1179
  %v1181 = vpop.f32.mrf.mxu0
  %1182 = vmatprep.mubr.f32.mxu0 0.0
  %1183 = vmatmul.mubr.f32.gmra.mxu0 %v1007
  %v1184 = vpop.f32.mrf.mxu0
  %v1185 = vadd.f32 0.0, %v1184
  %v1186 = vpop.f32.mrf.mxu0
  %1187 = vmatprep.mubr.f32.mxu0 0.0
  %1188 = vmatmul.mubr.f32.gmra.mxu0 %v1010
  %v1189 = vpop.f32.mrf.mxu0
  %v1190 = vadd.f32 0.0, %v1189
  %v1191 = vpop.f32.mrf.mxu0
  %1192 = vmatprep.mubr.f32.mxu0 0.0
  %1193 = vmatmul.mubr.f32.gmra.mxu0 %v1013
  %v1194 = vpop.f32.mrf.mxu0
  %v1195 = vadd.f32 0.0, %v1194
  %v1196 = vpop.f32.mrf.mxu0
  %1197 = vmatprep.mubr.f32.mxu0 0.0
  %1198 = vmatmul.mubr.f32.gmra.mxu0 %v1016
  %v1199 = vpop.f32.mrf.mxu0
  %v1200 = vadd.f32 0.0, %v1199
  %v1201 = vpop.f32.mrf.mxu0
  %1202 = vmatprep.mubr.f32.mxu0 0.0
  %1203 = vmatmul.mubr.f32.gmra.mxu0 %v1019
  %v1204 = vpop.f32.mrf.mxu0
  %v1205 = vadd.f32 0.0, %v1204
  %v1206 = vpop.f32.mrf.mxu0
  %1207 = vmatprep.mubr.f32.mxu0 0.0
  %1208 = vmatmul.mubr.f32.gmra.mxu0 %v1022
  %v1209 = vpop.f32.mrf.mxu0
  %v1210 = vadd.f32 0.0, %v1209
  %v1211 = vpop.f32.mrf.mxu0
  %1212 = vmatprep.mubr.f32.mxu0 0.0
  %1213 = vmatmul.mubr.f32.gmra.mxu0 %v1025
  %v1214 = vpop.f32.mrf.mxu0
  %v1215 = vadd.f32 0.0, %v1214
  %v1216 = vpop.f32.mrf.mxu0
  %1217 = vmatprep.mubr.f32.mxu0 0.0
  %1218 = vmatmul.mubr.f32.gmra.mxu0 %v1028
  %v1219 = vpop.f32.mrf.mxu0
  %v1220 = vadd.f32 0.0, %v1219
  %v1221 = vpop.f32.mrf.mxu0
  %1222 = vmatprep.mubr.f32.mxu0 0.0
  %1223 = vmatmul.mubr.f32.gmra.mxu0 %v1031
  %v1224 = vpop.f32.mrf.mxu0
  %v1225 = vadd.f32 0.0, %v1224
  %v1226 = vpop.f32.mrf.mxu0
  %1227 = vmatprep.mubr.f32.mxu0 0.0
  %1228 = vmatmul.mubr.f32.gmra.mxu0 %v1034
  %v1229 = vpop.f32.mrf.mxu0
  %v1230 = vadd.f32 0.0, %v1229
  %v1231 = vpop.f32.mrf.mxu0
  %1232 = vmatprep.mubr.f32.mxu0 0.0
  %1233 = vmatmul.mubr.f32.gmra.mxu0 %v1037
  %v1234 = vpop.f32.mrf.mxu0
  %v1235 = vadd.f32 0.0, %v1234
  %v1236 = vpop.f32.mrf.mxu0
  %1237 = vmatprep.mubr.f32.mxu0 0.0
  %1238 = vmatmul.mubr.f32.gmra.mxu0 %v1040
  %v1239 = vpop.f32.mrf.mxu0
  %v1240 = vadd.f32 0.0, %v1239
  %v1241 = vpop.f32.mrf.mxu0
  %1242 = vmatprep.mubr.f32.mxu0 0.0
  %1243 = vmatmul.mubr.f32.gmra.mxu0 %v1043
  %v1244 = vpop.f32.mrf.mxu0
  %v1245 = vadd.f32 0.0, %v1244
  %v1246 = vpop.f32.mrf.mxu0
  %1247 = vmatprep.mubr.f32.mxu0 0.0
  %1248 = vmatmul.mubr.f32.gmra.mxu0 %v1046
  %v1249 = vpop.f32.mrf.mxu0
  %v1250 = vadd.f32 0.0, %v1249
  %v1251 = vpop.f32.mrf.mxu0
  %1252 = vmatprep.mubr.f32.mxu0 0.0
  %1253 = vmatmul.mubr.f32.gmra.mxu0 %v1049
  %v1254 = vpop.f32.mrf.mxu0
  %v1255 = vadd.f32 0.0, %v1254
  %v1256 = vpop.f32.mrf.mxu0
  %1257 = vmatprep.mubr.f32.mxu0 0.0
  %1258 = vmatmul.mubr.f32.gmra.mxu0 %v1052
  %v1259 = vpop.f32.mrf.mxu0
  %v1260 = vadd.f32 0.0, %v1259
  %v1261 = vpop.f32.mrf.mxu0
  %1262 = vmatprep.mubr.f32.mxu0 0.0
  %1263 = vmatmul.mubr.f32.gmra.mxu0 %v1055
  %v1264 = vpop.f32.mrf.mxu0
  %v1265 = vadd.f32 0.0, %v1264
  %v1266 = vpop.f32.mrf.mxu0
  %1267 = vmatprep.mubr.f32.mxu0 0.0
  %1268 = vmatmul.mubr.f32.gmra.mxu0 %v1058
  %v1269 = vpop.f32.mrf.mxu0
  %v1270 = vadd.f32 0.0, %v1269
  %v1271 = vpop.f32.mrf.mxu0
  %1272 = vmatprep.mubr.f32.mxu0 0.0
  %1273 = vmatmul.mubr.f32.gmra.mxu0 %v1061
  %v1274 = vpop.f32.mrf.mxu0
  %v1275 = vadd.f32 0.0, %v1274
  %v1276 = vpop.f32.mrf.mxu0
  %1277 = vmatprep.mubr.f32.mxu0 0.0
  %1278 = vmatmul.mubr.f32.gmra.mxu0 %v1064
  %v1279 = vpop.f32.mrf.mxu0
  %v1280 = vadd.f32 0.0, %v1279
  %v1281 = vpop.f32.mrf.mxu0
  %1282 = vmatprep.mubr.f32.mxu0 0.0
  %1283 = vmatmul.mubr.f32.gmra.mxu0 %v1067
  %v1284 = vpop.f32.mrf.mxu0
  %v1285 = vadd.f32 0.0, %v1284
  %v1286 = vpop.f32.mrf.mxu0
  %1287 = vmatprep.mubr.f32.mxu0 0.0
  %1288 = vmatmul.mubr.f32.gmra.mxu0 %v1070
  %v1289 = vpop.f32.mrf.mxu0
  %v1290 = vadd.f32 0.0, %v1289
  %v1291 = vpop.f32.mrf.mxu0
  %1292 = vmatprep.mubr.f32.mxu0 0.0
  %1293 = vmatmul.mubr.f32.gmra.mxu0 %v1073
  %v1294 = vpop.f32.mrf.mxu0
  %v1295 = vadd.f32 0.0, %v1294
  %v1296 = vpop.f32.mrf.mxu0
  %1297 = vmatprep.mubr.f32.mxu0 0.0
  %1298 = vmatmul.mubr.f32.gmra.mxu0 %v1076
  %v1299 = vpop.f32.mrf.mxu0
  %v1300 = vadd.f32 0.0, %v1299
  %v1301 = vpop.f32.mrf.mxu0
  %1302 = vmatprep.mubr.f32.mxu0 0.0
  %1303 = vmatmul.mubr.f32.gmra.mxu0 %v1079
  %v1304 = vpop.f32.mrf.mxu0
  %v1305 = vadd.f32 0.0, %v1304
  %v1306 = vpop.f32.mrf.mxu0
  %1307 = vmatprep.mubr.f32.mxu0 0.0
  %1308 = vmatmul.mubr.f32.gmra.mxu0 %v1082
  %v1309 = vpop.f32.mrf.mxu0
  %v1310 = vadd.f32 0.0, %v1309
  %v1311 = vpop.f32.mrf.mxu0
  %1312 = vmatprep.mubr.f32.mxu0 0.0
  %1313 = vmatmul.mubr.f32.gmra.mxu0 %v1085
  %v1314 = vpop.f32.mrf.mxu0
  %v1315 = vadd.f32 0.0, %v1314
  %v1316 = vpop.f32.mrf.mxu0
  %1317 = vmatprep.mubr.f32.mxu0 0.0
  %1318 = vmatmul.mubr.f32.gmra.mxu0 %v1088
  %v1319 = vpop.f32.mrf.mxu0
  %v1320 = vadd.f32 0.0, %v1319
  %v1321 = vpop.f32.mrf.mxu0
  %1322 = vmatprep.mubr.f32.mxu0 0.0
  %1323 = vmatmul.mubr.f32.gmra.mxu0 %v1091
  %v1324 = vpop.f32.mrf.mxu0
  %v1325 = vadd.f32 0.0, %v1324
  %v1326 = vpop.f32.mrf.mxu0
  %1327 = vmatprep.mubr.f32.mxu0 0.0
  %1328 = vmatmul.mubr.f32.gmra.mxu0 %v1094
  %v1329 = vpop.f32.mrf.mxu0
  %v1330 = vadd.f32 0.0, %v1329
  %v1331 = vpop.f32.mrf.mxu0
  %1332 = vmatprep.mubr.f32.mxu0 0.0
  %1333 = vmatmul.mubr.f32.gmra.mxu0 %v1097
  %v1334 = vpop.f32.mrf.mxu0
  %v1335 = vadd.f32 0.0, %v1334
  %v1336 = vpop.f32.mrf.mxu0
  %1337 = vmatprep.mubr.f32.mxu0 0.0
  %1338 = vmatmul.mubr.f32.gmra.mxu0 %v1100
  %v1339 = vpop.f32.mrf.mxu0
  %v1340 = vadd.f32 0.0, %v1339
  %v1341 = vpop.f32.mrf.mxu0
  %1342 = vmatprep.mubr.f32.mxu0 0.0
  %1343 = vmatmul.mubr.f32.gmra.mxu0 %v1103
  %v1344 = vpop.f32.mrf.mxu0
  %v1345 = vadd.f32 0.0, %v1344
  %v1346 = vpop.f32.mrf.mxu0
  %1347 = vmatprep.mubr.f32.mxu0 0.0
  %1348 = vmatmul.mubr.f32.gmra.mxu0 %v1106
  %v1349 = vpop.f32.mrf.mxu0
  %v1350 = vadd.f32 0.0, %v1349
  %v1351 = vpop.f32.mrf.mxu0
  %1352 = vdwg.mxu0
  %v1354 = vsel %vm999, %v952, 0
  %v1357 = vsel %vm999, %v953, 0
  %1359 = vmatprep.subr.mxu0 0.0
  %1360 = vmatpush1.msra.mxu0 0.0
  %1361 = vmatprep.subr.mxu0 0.0
  %1362 = vmatpush1.msra.mxu0 0.0
  %1363 = vmatprep.subr.mxu0 0.0
  %1364 = vmatpush1.msra.mxu0 0.0
  %1365 = vmatprep.subr.mxu0 0.0
  %1366 = vmatpush1.msra.mxu0 0.0
  %1367 = vmatprep.subr.mxu0 0.0
  %1368 = vmatpush1.msra.mxu0 0.0
  %1369 = vmatprep.subr.mxu0 0.0
  %1370 = vmatpush1.msra.mxu0 0.0
  %1371 = vmatprep.subr.mxu0 0.0
  %1372 = vmatpush1.msra.mxu0 0.0
  %1373 = vmatprep.subr.mxu0 0.0
  %1374 = vmatpush1.msra.mxu0 0.0
  %1375 = vmatprep.subr.mxu0 0.0
  %1376 = vmatpush1.msra.mxu0 0.0
  %1377 = vmatprep.subr.mxu0 0.0
  %1378 = vmatpush1.msra.mxu0 0.0
  %1379 = vmatprep.subr.mxu0 0.0
  %1380 = vmatpush1.msra.mxu0 0.0
  %1381 = vmatprep.subr.mxu0 0.0
  %1382 = vmatpush1.msra.mxu0 0.0
  %1383 = vmatprep.subr.mxu0 0.0
  %1384 = vmatpush1.msra.mxu0 0.0
  %1385 = vmatprep.subr.mxu0 0.0
  %1386 = vmatpush1.msra.mxu0 %v994
  %1387 = vmatprep.subr.mxu0 0.0
  %1388 = vmatpush1.msra.mxu0 %v993
  %1389 = vmatprep.subr.mxu0 0.0
  %1390 = vmatpush1.msra.mxu0 %v992
  %1391 = vmatprep.subr.mxu0 0.0
  %1392 = vmatpush2.msra.mxu0 0.0
  %1393 = vmatprep.subr.mxu0 0.0
  %1394 = vmatpush2.msra.mxu0 0.0
  %1395 = vmatprep.subr.mxu0 0.0
  %1396 = vmatpush2.msra.mxu0 0.0
  %1397 = vmatprep.subr.mxu0 0.0
  %1398 = vmatpush2.msra.mxu0 0.0
  %1399 = vmatprep.subr.mxu0 0.0
  %1400 = vmatpush2.msra.mxu0 0.0
  %1401 = vmatprep.subr.mxu0 0.0
  %1402 = vmatpush2.msra.mxu0 0.0
  %1403 = vmatprep.subr.mxu0 0.0
  %1404 = vmatpush2.msra.mxu0 0.0
  %1405 = vmatprep.subr.mxu0 0.0
  %1406 = vmatpush2.msra.mxu0 0.0
  %1407 = vmatprep.subr.mxu0 0.0
  %1408 = vmatpush2.msra.mxu0 0.0
  %1409 = vmatprep.subr.mxu0 0.0
  %1410 = vmatpush2.msra.mxu0 0.0
  %1411 = vmatprep.subr.mxu0 0.0
  %1412 = vmatpush2.msra.mxu0 0.0
  %1413 = vmatprep.subr.mxu0 0.0
  %1414 = vmatpush2.msra.mxu0 0.0
  %1415 = vmatprep.subr.mxu0 0.0
  %1416 = vmatpush2.msra.mxu0 0.0
  %1417 = vmatprep.subr.mxu0 0.0
  %1418 = vmatpush2.msra.mxu0 0.0
  %1419 = vmatprep.subr.mxu0 0.0
  %1420 = vmatpush2.msra.mxu0 0.0
  %1421 = vmatprep.subr.mxu0 0.0
  %1422 = vmatpush2.msra.mxu0 0.0
  %1423 = vmatprep.mubr.f32.mxu0 0.0
  %1424 = vmatmul.mubr.f32.gmra.mxu0 %v1354
  %v1425 = vpop.f32.mrf.mxu0
  %v1426 = vadd.f32 %v1175, %v1425
  %v1427 = vpop.f32.mrf.mxu0
  %1428 = vmatprep.mubr.f32.mxu0 0.0
  %1429 = vmatmul.mubr.f32.gmra.mxu0 %v1357
  %v1430 = vpop.f32.mrf.mxu0
  %v1431 = vadd.f32 %v1180, %v1430
  %v1432 = vpop.f32.mrf.mxu0
  %1433 = vmatprep.mubr.f32.mxu0 0.0
  %1434 = vmatmul.mubr.f32.gmra.mxu0 %v1001
  %v1435 = vpop.f32.mrf.mxu0
  %v1436 = vadd.f32 %v1185, %v1435
  %v1437 = vpop.f32.mrf.mxu0
  %1438 = vmatprep.mubr.f32.mxu0 0.0
  %1439 = vmatmul.mubr.f32.gmra.mxu0 %v1004
  %v1440 = vpop.f32.mrf.mxu0
  %v1441 = vadd.f32 %v1190, %v1440
  %v1442 = vpop.f32.mrf.mxu0
  %1443 = vmatprep.mubr.f32.mxu0 0.0
  %1444 = vmatmul.mubr.f32.gmra.mxu0 %v1007
  %v1445 = vpop.f32.mrf.mxu0
  %v1446 = vadd.f32 %v1195, %v1445
  %v1447 = vpop.f32.mrf.mxu0
  %1448 = vmatprep.mubr.f32.mxu0 0.0
  %1449 = vmatmul.mubr.f32.gmra.mxu0 %v1010
  %v1450 = vpop.f32.mrf.mxu0
  %v1451 = vadd.f32 %v1200, %v1450
  %v1452 = vpop.f32.mrf.mxu0
  %1453 = vmatprep.mubr.f32.mxu0 0.0
  %1454 = vmatmul.mubr.f32.gmra.mxu0 %v1013
  %v1455 = vpop.f32.mrf.mxu0
  %v1456 = vadd.f32 %v1205, %v1455
  %v1457 = vpop.f32.mrf.mxu0
  %1458 = vmatprep.mubr.f32.mxu0 0.0
  %1459 = vmatmul.mubr.f32.gmra.mxu0 %v1016
  %v1460 = vpop.f32.mrf.mxu0
  %v1461 = vadd.f32 %v1210, %v1460
  %v1462 = vpop.f32.mrf.mxu0
  %1463 = vmatprep.mubr.f32.mxu0 0.0
  %1464 = vmatmul.mubr.f32.gmra.mxu0 %v1019
  %v1465 = vpop.f32.mrf.mxu0
  %v1466 = vadd.f32 %v1215, %v1465
  %v1467 = vpop.f32.mrf.mxu0
  %1468 = vmatprep.mubr.f32.mxu0 0.0
  %1469 = vmatmul.mubr.f32.gmra.mxu0 %v1022
  %v1470 = vpop.f32.mrf.mxu0
  %v1471 = vadd.f32 %v1220, %v1470
  %v1472 = vpop.f32.mrf.mxu0
  %1473 = vmatprep.mubr.f32.mxu0 0.0
  %1474 = vmatmul.mubr.f32.gmra.mxu0 %v1025
  %v1475 = vpop.f32.mrf.mxu0
  %v1476 = vadd.f32 %v1225, %v1475
  %v1477 = vpop.f32.mrf.mxu0
  %1478 = vmatprep.mubr.f32.mxu0 0.0
  %1479 = vmatmul.mubr.f32.gmra.mxu0 %v1028
  %v1480 = vpop.f32.mrf.mxu0
  %v1481 = vadd.f32 %v1230, %v1480
  %v1482 = vpop.f32.mrf.mxu0
  %1483 = vmatprep.mubr.f32.mxu0 0.0
  %1484 = vmatmul.mubr.f32.gmra.mxu0 %v1031
  %v1485 = vpop.f32.mrf.mxu0
  %v1486 = vadd.f32 %v1235, %v1485
  %v1487 = vpop.f32.mrf.mxu0
  %1488 = vmatprep.mubr.f32.mxu0 0.0
  %1489 = vmatmul.mubr.f32.gmra.mxu0 %v1034
  %v1490 = vpop.f32.mrf.mxu0
  %v1491 = vadd.f32 %v1240, %v1490
  %v1492 = vpop.f32.mrf.mxu0
  %1493 = vmatprep.mubr.f32.mxu0 0.0
  %1494 = vmatmul.mubr.f32.gmra.mxu0 %v1037
  %v1495 = vpop.f32.mrf.mxu0
  %v1496 = vadd.f32 %v1245, %v1495
  %v1497 = vpop.f32.mrf.mxu0
  %1498 = vmatprep.mubr.f32.mxu0 0.0
  %1499 = vmatmul.mubr.f32.gmra.mxu0 %v1040
  %v1500 = vpop.f32.mrf.mxu0
  %v1501 = vadd.f32 %v1250, %v1500
  %v1502 = vpop.f32.mrf.mxu0
  %1503 = vmatprep.mubr.f32.mxu0 0.0
  %1504 = vmatmul.mubr.f32.gmra.mxu0 %v1043
  %v1505 = vpop.f32.mrf.mxu0
  %v1506 = vadd.f32 %v1255, %v1505
  %v1507 = vpop.f32.mrf.mxu0
  %1508 = vmatprep.mubr.f32.mxu0 0.0
  %1509 = vmatmul.mubr.f32.gmra.mxu0 %v1046
  %v1510 = vpop.f32.mrf.mxu0
  %v1511 = vadd.f32 %v1260, %v1510
  %v1512 = vpop.f32.mrf.mxu0
  %1513 = vmatprep.mubr.f32.mxu0 0.0
  %1514 = vmatmul.mubr.f32.gmra.mxu0 %v1049
  %v1515 = vpop.f32.mrf.mxu0
  %v1516 = vadd.f32 %v1265, %v1515
  %v1517 = vpop.f32.mrf.mxu0
  %1518 = vmatprep.mubr.f32.mxu0 0.0
  %1519 = vmatmul.mubr.f32.gmra.mxu0 %v1052
  %v1520 = vpop.f32.mrf.mxu0
  %v1521 = vadd.f32 %v1270, %v1520
  %v1522 = vpop.f32.mrf.mxu0
  %1523 = vmatprep.mubr.f32.mxu0 0.0
  %1524 = vmatmul.mubr.f32.gmra.mxu0 %v1055
  %v1525 = vpop.f32.mrf.mxu0
  %v1526 = vadd.f32 %v1275, %v1525
  %v1527 = vpop.f32.mrf.mxu0
  %1528 = vmatprep.mubr.f32.mxu0 0.0
  %1529 = vmatmul.mubr.f32.gmra.mxu0 %v1058
  %v1530 = vpop.f32.mrf.mxu0
  %v1531 = vadd.f32 %v1280, %v1530
  %v1532 = vpop.f32.mrf.mxu0
  %1533 = vmatprep.mubr.f32.mxu0 0.0
  %1534 = vmatmul.mubr.f32.gmra.mxu0 %v1061
  %v1535 = vpop.f32.mrf.mxu0
  %v1536 = vadd.f32 %v1285, %v1535
  %v1537 = vpop.f32.mrf.mxu0
  %1538 = vmatprep.mubr.f32.mxu0 0.0
  %1539 = vmatmul.mubr.f32.gmra.mxu0 %v1064
  %v1540 = vpop.f32.mrf.mxu0
  %v1541 = vadd.f32 %v1290, %v1540
  %v1542 = vpop.f32.mrf.mxu0
  %1543 = vmatprep.mubr.f32.mxu0 0.0
  %1544 = vmatmul.mubr.f32.gmra.mxu0 %v1067
  %v1545 = vpop.f32.mrf.mxu0
  %v1546 = vadd.f32 %v1295, %v1545
  %v1547 = vpop.f32.mrf.mxu0
  %1548 = vmatprep.mubr.f32.mxu0 0.0
  %1549 = vmatmul.mubr.f32.gmra.mxu0 %v1070
  %v1550 = vpop.f32.mrf.mxu0
  %v1551 = vadd.f32 %v1300, %v1550
  %v1552 = vpop.f32.mrf.mxu0
  %1553 = vmatprep.mubr.f32.mxu0 0.0
  %1554 = vmatmul.mubr.f32.gmra.mxu0 %v1073
  %v1555 = vpop.f32.mrf.mxu0
  %v1556 = vadd.f32 %v1305, %v1555
  %v1557 = vpop.f32.mrf.mxu0
  %1558 = vmatprep.mubr.f32.mxu0 0.0
  %1559 = vmatmul.mubr.f32.gmra.mxu0 %v1076
  %v1560 = vpop.f32.mrf.mxu0
  %v1561 = vadd.f32 %v1310, %v1560
  %v1562 = vpop.f32.mrf.mxu0
  %1563 = vmatprep.mubr.f32.mxu0 0.0
  %1564 = vmatmul.mubr.f32.gmra.mxu0 %v1079
  %v1565 = vpop.f32.mrf.mxu0
  %v1566 = vadd.f32 %v1315, %v1565
  %v1567 = vpop.f32.mrf.mxu0
  %1568 = vmatprep.mubr.f32.mxu0 0.0
  %1569 = vmatmul.mubr.f32.gmra.mxu0 %v1082
  %v1570 = vpop.f32.mrf.mxu0
  %v1571 = vadd.f32 %v1320, %v1570
  %v1572 = vpop.f32.mrf.mxu0
  %1573 = vmatprep.mubr.f32.mxu0 0.0
  %1574 = vmatmul.mubr.f32.gmra.mxu0 %v1085
  %v1575 = vpop.f32.mrf.mxu0
  %v1576 = vadd.f32 %v1325, %v1575
  %v1577 = vpop.f32.mrf.mxu0
  %1578 = vmatprep.mubr.f32.mxu0 0.0
  %1579 = vmatmul.mubr.f32.gmra.mxu0 %v1088
  %v1580 = vpop.f32.mrf.mxu0
  %v1581 = vadd.f32 %v1330, %v1580
  %v1582 = vpop.f32.mrf.mxu0
  %1583 = vmatprep.mubr.f32.mxu0 0.0
  %1584 = vmatmul.mubr.f32.gmra.mxu0 %v1091
  %v1585 = vpop.f32.mrf.mxu0
  %v1586 = vadd.f32 %v1335, %v1585
  %v1587 = vpop.f32.mrf.mxu0
  %1588 = vmatprep.mubr.f32.mxu0 0.0
  %1589 = vmatmul.mubr.f32.gmra.mxu0 %v1094
  %v1590 = vpop.f32.mrf.mxu0
  %v1591 = vadd.f32 %v1340, %v1590
  %v1592 = vpop.f32.mrf.mxu0
  %1593 = vmatprep.mubr.f32.mxu0 0.0
  %1594 = vmatmul.mubr.f32.gmra.mxu0 %v1097
  %v1595 = vpop.f32.mrf.mxu0
  %v1596 = vadd.f32 %v1345, %v1595
  %v1597 = vpop.f32.mrf.mxu0
  %1598 = vmatprep.mubr.f32.mxu0 0.0
  %1599 = vmatmul.mubr.f32.gmra.mxu0 %v1100
  %v1600 = vpop.f32.mrf.mxu0
  %v1601 = vadd.f32 %v1350, %v1600
  %v1602 = vpop.f32.mrf.mxu0
  %1603 = vdwg.mxu0
  %s1604 = scalar_lea.vmem %s2, 48
  %v1605 = vld [vmem:[%s1604] sm:$0xff]
  %v1606 = vld [vmem:[%s1604 + $0x8] sm:$0xff]
  %v1607 = vld [vmem:[%s1604 + $0x10] sm:$0xff]
  %v1609 = vsel %vm999, %v990, 0
  %v1612 = vsel %vm999, %v991, 0
  %1614 = vmatprep.subr.mxu0 0.0
  %1615 = vmatpush1.msra.mxu0 0.0
  %1616 = vmatprep.subr.mxu0 0.0
  %1617 = vmatpush1.msra.mxu0 0.0
  %1618 = vmatprep.subr.mxu0 0.0
  %1619 = vmatpush1.msra.mxu0 0.0
  %1620 = vmatprep.subr.mxu0 0.0
  %1621 = vmatpush1.msra.mxu0 0.0
  %1622 = vmatprep.subr.mxu0 0.0
  %1623 = vmatpush1.msra.mxu0 0.0
  %1624 = vmatprep.subr.mxu0 0.0
  %1625 = vmatpush1.msra.mxu0 0.0
  %1626 = vmatprep.subr.mxu0 0.0
  %1627 = vmatpush1.msra.mxu0 0.0
  %1628 = vmatprep.subr.mxu0 0.0
  %1629 = vmatpush1.msra.mxu0 0.0
  %1630 = vmatprep.subr.mxu0 0.0
  %1631 = vmatpush1.msra.mxu0 0.0
  %1632 = vmatprep.subr.mxu0 0.0
  %1633 = vmatpush1.msra.mxu0 0.0
  %1634 = vmatprep.subr.mxu0 0.0
  %1635 = vmatpush1.msra.mxu0 0.0
  %1636 = vmatprep.subr.mxu0 0.0
  %1637 = vmatpush1.msra.mxu0 0.0
  %1638 = vmatprep.subr.mxu0 0.0
  %1639 = vmatpush1.msra.mxu0 0.0
  %1640 = vmatprep.subr.mxu0 0.0
  %1641 = vmatpush1.msra.mxu0 %v1607
  %1642 = vmatprep.subr.mxu0 0.0
  %1643 = vmatpush1.msra.mxu0 %v1606
  %1644 = vmatprep.subr.mxu0 0.0
  %1645 = vmatpush1.msra.mxu0 %v1605
  %1646 = vmatprep.subr.mxu0 0.0
  %1647 = vmatpush2.msra.mxu0 0.0
  %1648 = vmatprep.subr.mxu0 0.0
  %1649 = vmatpush2.msra.mxu0 0.0
  %1650 = vmatprep.subr.mxu0 0.0
  %1651 = vmatpush2.msra.mxu0 0.0
  %1652 = vmatprep.subr.mxu0 0.0
  %1653 = vmatpush2.msra.mxu0 0.0
  %1654 = vmatprep.subr.mxu0 0.0
  %1655 = vmatpush2.msra.mxu0 0.0
  %1656 = vmatprep.subr.mxu0 0.0
  %1657 = vmatpush2.msra.mxu0 0.0
  %1658 = vmatprep.subr.mxu0 0.0
  %1659 = vmatpush2.msra.mxu0 0.0
  %1660 = vmatprep.subr.mxu0 0.0
  %1661 = vmatpush2.msra.mxu0 0.0
  %1662 = vmatprep.subr.mxu0 0.0
  %1663 = vmatpush2.msra.mxu0 0.0
  %1664 = vmatprep.subr.mxu0 0.0
  %1665 = vmatpush2.msra.mxu0 0.0
  %1666 = vmatprep.subr.mxu0 0.0
  %1667 = vmatpush2.msra.mxu0 0.0
  %1668 = vmatprep.subr.mxu0 0.0
  %1669 = vmatpush2.msra.mxu0 0.0
  %1670 = vmatprep.subr.mxu0 0.0
  %1671 = vmatpush2.msra.mxu0 0.0
  %1672 = vmatprep.subr.mxu0 0.0
  %1673 = vmatpush2.msra.mxu0 0.0
  %1674 = vmatprep.subr.mxu0 0.0
  %1675 = vmatpush2.msra.mxu0 0.0
  %1676 = vmatprep.subr.mxu0 0.0
  %1677 = vmatpush2.msra.mxu0 0.0
  %1678 = vmatprep.mubr.f32.mxu0 0.0
  %1679 = vmatmul.mubr.f32.gmra.mxu0 %v1007
  %v1680 = vpop.f32.mrf.mxu0
  %v1681 = vadd.f32 0.0, %v1680
  %v1682 = vpop.f32.mrf.mxu0
  %1683 = vmatprep.mubr.f32.mxu0 0.0
  %1684 = vmatmul.mubr.f32.gmra.mxu0 %v1010
  %v1685 = vpop.f32.mrf.mxu0
  %v1686 = vadd.f32 0.0, %v1685
  %v1687 = vpop.f32.mrf.mxu0
  %1688 = vmatprep.mubr.f32.mxu0 0.0
  %1689 = vmatmul.mubr.f32.gmra.mxu0 %v1013
  %v1690 = vpop.f32.mrf.mxu0
  %v1691 = vadd.f32 0.0, %v1690
  %v1692 = vpop.f32.mrf.mxu0
  %1693 = vmatprep.mubr.f32.mxu0 0.0
  %1694 = vmatmul.mubr.f32.gmra.mxu0 %v1016
  %v1695 = vpop.f32.mrf.mxu0
  %v1696 = vadd.f32 0.0, %v1695
  %v1697 = vpop.f32.mrf.mxu0
  %1698 = vmatprep.mubr.f32.mxu0 0.0
  %1699 = vmatmul.mubr.f32.gmra.mxu0 %v1019
  %v1700 = vpop.f32.mrf.mxu0
  %v1701 = vadd.f32 0.0, %v1700
  %v1702 = vpop.f32.mrf.mxu0
  %1703 = vmatprep.mubr.f32.mxu0 0.0
  %1704 = vmatmul.mubr.f32.gmra.mxu0 %v1022
  %v1705 = vpop.f32.mrf.mxu0
  %v1706 = vadd.f32 0.0, %v1705
  %v1707 = vpop.f32.mrf.mxu0
  %1708 = vmatprep.mubr.f32.mxu0 0.0
  %1709 = vmatmul.mubr.f32.gmra.mxu0 %v1025
  %v1710 = vpop.f32.mrf.mxu0
  %v1711 = vadd.f32 0.0, %v1710
  %v1712 = vpop.f32.mrf.mxu0
  %1713 = vmatprep.mubr.f32.mxu0 0.0
  %1714 = vmatmul.mubr.f32.gmra.mxu0 %v1028
  %v1715 = vpop.f32.mrf.mxu0
  %v1716 = vadd.f32 0.0, %v1715
  %v1717 = vpop.f32.mrf.mxu0
  %1718 = vmatprep.mubr.f32.mxu0 0.0
  %1719 = vmatmul.mubr.f32.gmra.mxu0 %v1031
  %v1720 = vpop.f32.mrf.mxu0
  %v1721 = vadd.f32 0.0, %v1720
  %v1722 = vpop.f32.mrf.mxu0
  %1723 = vmatprep.mubr.f32.mxu0 0.0
  %1724 = vmatmul.mubr.f32.gmra.mxu0 %v1034
  %v1725 = vpop.f32.mrf.mxu0
  %v1726 = vadd.f32 0.0, %v1725
  %v1727 = vpop.f32.mrf.mxu0
  %1728 = vmatprep.mubr.f32.mxu0 0.0
  %1729 = vmatmul.mubr.f32.gmra.mxu0 %v1037
  %v1730 = vpop.f32.mrf.mxu0
  %v1731 = vadd.f32 0.0, %v1730
  %v1732 = vpop.f32.mrf.mxu0
  %1733 = vmatprep.mubr.f32.mxu0 0.0
  %1734 = vmatmul.mubr.f32.gmra.mxu0 %v1040
  %v1735 = vpop.f32.mrf.mxu0
  %v1736 = vadd.f32 0.0, %v1735
  %v1737 = vpop.f32.mrf.mxu0
  %1738 = vmatprep.mubr.f32.mxu0 0.0
  %1739 = vmatmul.mubr.f32.gmra.mxu0 %v1043
  %v1740 = vpop.f32.mrf.mxu0
  %v1741 = vadd.f32 0.0, %v1740
  %v1742 = vpop.f32.mrf.mxu0
  %1743 = vmatprep.mubr.f32.mxu0 0.0
  %1744 = vmatmul.mubr.f32.gmra.mxu0 %v1046
  %v1745 = vpop.f32.mrf.mxu0
  %v1746 = vadd.f32 0.0, %v1745
  %v1747 = vpop.f32.mrf.mxu0
  %1748 = vmatprep.mubr.f32.mxu0 0.0
  %1749 = vmatmul.mubr.f32.gmra.mxu0 %v1049
  %v1750 = vpop.f32.mrf.mxu0
  %v1751 = vadd.f32 0.0, %v1750
  %v1752 = vpop.f32.mrf.mxu0
  %1753 = vmatprep.mubr.f32.mxu0 0.0
  %1754 = vmatmul.mubr.f32.gmra.mxu0 %v1052
  %v1755 = vpop.f32.mrf.mxu0
  %v1756 = vadd.f32 0.0, %v1755
  %v1757 = vpop.f32.mrf.mxu0
  %1758 = vmatprep.mubr.f32.mxu0 0.0
  %1759 = vmatmul.mubr.f32.gmra.mxu0 %v1055
  %v1760 = vpop.f32.mrf.mxu0
  %v1761 = vadd.f32 0.0, %v1760
  %v1762 = vpop.f32.mrf.mxu0
  %1763 = vmatprep.mubr.f32.mxu0 0.0
  %1764 = vmatmul.mubr.f32.gmra.mxu0 %v1058
  %v1765 = vpop.f32.mrf.mxu0
  %v1766 = vadd.f32 0.0, %v1765
  %v1767 = vpop.f32.mrf.mxu0
  %1768 = vmatprep.mubr.f32.mxu0 0.0
  %1769 = vmatmul.mubr.f32.gmra.mxu0 %v1061
  %v1770 = vpop.f32.mrf.mxu0
  %v1771 = vadd.f32 0.0, %v1770
  %v1772 = vpop.f32.mrf.mxu0
  %1773 = vmatprep.mubr.f32.mxu0 0.0
  %1774 = vmatmul.mubr.f32.gmra.mxu0 %v1064
  %v1775 = vpop.f32.mrf.mxu0
  %v1776 = vadd.f32 0.0, %v1775
  %v1777 = vpop.f32.mrf.mxu0
  %1778 = vmatprep.mubr.f32.mxu0 0.0
  %1779 = vmatmul.mubr.f32.gmra.mxu0 %v1067
  %v1780 = vpop.f32.mrf.mxu0
  %v1781 = vadd.f32 0.0, %v1780
  %v1782 = vpop.f32.mrf.mxu0
  %1783 = vmatprep.mubr.f32.mxu0 0.0
  %1784 = vmatmul.mubr.f32.gmra.mxu0 %v1070
  %v1785 = vpop.f32.mrf.mxu0
  %v1786 = vadd.f32 0.0, %v1785
  %v1787 = vpop.f32.mrf.mxu0
  %1788 = vmatprep.mubr.f32.mxu0 0.0
  %1789 = vmatmul.mubr.f32.gmra.mxu0 %v1073
  %v1790 = vpop.f32.mrf.mxu0
  %v1791 = vadd.f32 0.0, %v1790
  %v1792 = vpop.f32.mrf.mxu0
  %1793 = vmatprep.mubr.f32.mxu0 0.0
  %1794 = vmatmul.mubr.f32.gmra.mxu0 %v1076
  %v1795 = vpop.f32.mrf.mxu0
  %v1796 = vadd.f32 0.0, %v1795
  %v1797 = vpop.f32.mrf.mxu0
  %1798 = vmatprep.mubr.f32.mxu0 0.0
  %1799 = vmatmul.mubr.f32.gmra.mxu0 %v1079
  %v1800 = vpop.f32.mrf.mxu0
  %v1801 = vadd.f32 0.0, %v1800
  %v1802 = vpop.f32.mrf.mxu0
  %1803 = vmatprep.mubr.f32.mxu0 0.0
  %1804 = vmatmul.mubr.f32.gmra.mxu0 %v1082
  %v1805 = vpop.f32.mrf.mxu0
  %v1806 = vadd.f32 0.0, %v1805
  %v1807 = vpop.f32.mrf.mxu0
  %1808 = vmatprep.mubr.f32.mxu0 0.0
  %1809 = vmatmul.mubr.f32.gmra.mxu0 %v1085
  %v1810 = vpop.f32.mrf.mxu0
  %v1811 = vadd.f32 0.0, %v1810
  %v1812 = vpop.f32.mrf.mxu0
  %1813 = vmatprep.mubr.f32.mxu0 0.0
  %1814 = vmatmul.mubr.f32.gmra.mxu0 %v1088
  %v1815 = vpop.f32.mrf.mxu0
  %v1816 = vadd.f32 0.0, %v1815
  %v1817 = vpop.f32.mrf.mxu0
  %1818 = vmatprep.mubr.f32.mxu0 0.0
  %1819 = vmatmul.mubr.f32.gmra.mxu0 %v1091
  %v1820 = vpop.f32.mrf.mxu0
  %v1821 = vadd.f32 0.0, %v1820
  %v1822 = vpop.f32.mrf.mxu0
  %1823 = vmatprep.mubr.f32.mxu0 0.0
  %1824 = vmatmul.mubr.f32.gmra.mxu0 %v1094
  %v1825 = vpop.f32.mrf.mxu0
  %v1826 = vadd.f32 0.0, %v1825
  %v1827 = vpop.f32.mrf.mxu0
  %1828 = vmatprep.mubr.f32.mxu0 0.0
  %1829 = vmatmul.mubr.f32.gmra.mxu0 %v1097
  %v1830 = vpop.f32.mrf.mxu0
  %v1831 = vadd.f32 0.0, %v1830
  %v1832 = vpop.f32.mrf.mxu0
  %1833 = vmatprep.mubr.f32.mxu0 0.0
  %1834 = vmatmul.mubr.f32.gmra.mxu0 %v1100
  %v1835 = vpop.f32.mrf.mxu0
  %v1836 = vadd.f32 0.0, %v1835
  %v1837 = vpop.f32.mrf.mxu0
  %1838 = vmatprep.mubr.f32.mxu0 0.0
  %1839 = vmatmul.mubr.f32.gmra.mxu0 %v1103
  %v1840 = vpop.f32.mrf.mxu0
  %v1841 = vadd.f32 0.0, %v1840
  %v1842 = vpop.f32.mrf.mxu0
  %1843 = vmatprep.mubr.f32.mxu0 0.0
  %1844 = vmatmul.mubr.f32.gmra.mxu0 %v1106
  %v1845 = vpop.f32.mrf.mxu0
  %v1846 = vadd.f32 0.0, %v1845
  %v1847 = vpop.f32.mrf.mxu0
  %1848 = vmatprep.mubr.f32.mxu0 0.0
  %1849 = vmatmul.mubr.f32.gmra.mxu0 %v1609
  %v1850 = vpop.f32.mrf.mxu0
  %v1851 = vadd.f32 0.0, %v1850
  %v1852 = vpop.f32.mrf.mxu0
  %1853 = vmatprep.mubr.f32.mxu0 0.0
  %1854 = vmatmul.mubr.f32.gmra.mxu0 %v1612
  %v1855 = vpop.f32.mrf.mxu0
  %v1856 = vadd.f32 0.0, %v1855
  %v1857 = vpop.f32.mrf.mxu0
  %1858 = vdwg.mxu0
  %v1859 = vadd.f32 %v1426, %v1681
  %v1860 = vadd.f32 %v1431, %v1686
  %v1861 = vadd.f32 %v1436, %v1691
  %v1862 = vadd.f32 %v1441, %v1696
  %v1863 = vadd.f32 %v1446, %v1701
  %v1864 = vadd.f32 %v1451, %v1706
  %v1865 = vadd.f32 %v1456, %v1711
  %v1866 = vadd.f32 %v1461, %v1716
  %v1867 = vadd.f32 %v1466, %v1721
  %v1868 = vadd.f32 %v1471, %v1726
  %v1869 = vadd.f32 %v1476, %v1731
  %v1870 = vadd.f32 %v1481, %v1736
  %v1871 = vadd.f32 %v1486, %v1741
  %v1872 = vadd.f32 %v1491, %v1746
  %v1873 = vadd.f32 %v1496, %v1751
  %v1874 = vadd.f32 %v1501, %v1756
  %v1875 = vadd.f32 %v1506, %v1761
  %v1876 = vadd.f32 %v1511, %v1766
  %v1877 = vadd.f32 %v1516, %v1771
  %v1878 = vadd.f32 %v1521, %v1776
  %v1879 = vadd.f32 %v1526, %v1781
  %v1880 = vadd.f32 %v1531, %v1786
  %v1881 = vadd.f32 %v1536, %v1791
  %v1882 = vadd.f32 %v1541, %v1796
  %v1883 = vadd.f32 %v1546, %v1801
  %v1884 = vadd.f32 %v1551, %v1806
  %v1885 = vadd.f32 %v1556, %v1811
  %v1886 = vadd.f32 %v1561, %v1816
  %v1887 = vadd.f32 %v1566, %v1821
  %v1888 = vadd.f32 %v1571, %v1826
  %v1889 = vadd.f32 %v1576, %v1831
  %v1890 = vadd.f32 %v1581, %v1836
  %v1891 = vadd.f32 %v1586, %v1841
  %v1892 = vadd.f32 %v1591, %v1846
  %v1893 = vadd.f32 %v1596, %v1851
  %v1894 = vadd.f32 %v1601, %v1856
  %v1895 = vrot.slane %v19, 1
  %v1896 = vrot.slane %v20, 1
  %v1897 = vsel %vm506, %v1895, %v1896
  %v1898 = vrot.slane %v21, 1
  %v1899 = vsel %vm506, %v1896, %v1898
  %v1900 = vrot.slane %v22, 1
  %v1901 = vsel %vm506, %v1898, %v1900
  %v1902 = vrot.slane %v23, 1
  %v1903 = vsel %vm506, %v1900, %v1902
  %v1904 = vrot.slane %v24, 1
  %v1905 = vsel %vm506, %v1902, %v1904
  %v1906 = vrot.slane %v25, 1
  %v1907 = vsel %vm506, %v1904, %v1906
  %v1908 = vrot.slane %v26, 1
  %v1909 = vsel %vm506, %v1906, %v1908
  %v1910 = vrot.slane %v27, 1
  %v1911 = vsel %vm506, %v1908, %v1910
  %v1912 = vrot.slane %v28, 1
  %v1913 = vsel %vm506, %v1910, %v1912
  %v1914 = vrot.slane %v29, 1
  %v1915 = vsel %vm506, %v1912, %v1914
  %v1916 = vrot.slane %v30, 1
  %v1917 = vsel %vm506, %v1914, %v1916
  %v1918 = vrot.slane %v31, 1
  %v1919 = vsel %vm506, %v1916, %v1918
  %v1920 = vrot.slane %v32, 1
  %v1921 = vsel %vm506, %v1918, %v1920
  %v1922 = vrot.slane %v33, 1
  %v1923 = vsel %vm506, %v1920, %v1922
  %v1924 = vrot.slane %v34, 1
  %v1925 = vsel %vm506, %v1922, %v1924
  %v1926 = vrot.slane %v35, 1
  %v1927 = vsel %vm506, %v1924, %v1926
  %v1928 = vrot.slane %v36, 1
  %v1929 = vsel %vm506, %v1926, %v1928
  %v1930 = vrot.slane %v37, 1
  %v1931 = vsel %vm506, %v1928, %v1930
  %v1932 = vrot.slane %v38, 1
  %v1933 = vsel %vm506, %v1930, %v1932
  %v1934 = vrot.slane %v39, 1
  %v1935 = vsel %vm506, %v1932, %v1934
  %v1936 = vrot.slane %v40, 1
  %v1937 = vsel %vm506, %v1934, %v1936
  %v1938 = vrot.slane %v41, 1
  %v1939 = vsel %vm506, %v1936, %v1938
  %v1940 = vrot.slane %v42, 1
  %v1941 = vsel %vm506, %v1938, %v1940
  %v1942 = vrot.slane %v43, 1
  %v1943 = vsel %vm506, %v1940, %v1942
  %v1944 = vrot.slane %v44, 1
  %v1945 = vsel %vm506, %v1942, %v1944
  %v1946 = vrot.slane %v45, 1
  %v1947 = vsel %vm506, %v1944, %v1946
  %v1948 = vrot.slane %v46, 1
  %v1949 = vsel %vm506, %v1946, %v1948
  %v1950 = vrot.slane %v47, 1
  %v1951 = vsel %vm506, %v1948, %v1950
  %v1952 = vrot.slane %v48, 1
  %v1953 = vsel %vm506, %v1950, %v1952
  %v1954 = vrot.slane %v49, 1
  %v1955 = vsel %vm506, %v1952, %v1954
  %v1956 = vrot.slane %v50, 1
  %v1957 = vsel %vm506, %v1954, %v1956
  %v1958 = vrot.slane %v51, 1
  %v1959 = vsel %vm506, %v1956, %v1958
  %v1960 = vrot.slane %v52, 1
  %v1961 = vsel %vm506, %v1958, %v1960
  %v1962 = vrot.slane %v53, 1
  %v1963 = vsel %vm506, %v1960, %v1962
  %v1964 = vrot.slane %v54, 1
  %v1965 = vsel %vm506, %v1962, %v1964
  %v1966 = vrot.slane %v55, 1
  %v1967 = vsel %vm506, %v1964, %v1966
  %1968 = vrot.lane.b32.xlu0 %v1897, 8
  %v1969 = vpop.permute.xlu0 %1968
  %1970 = vrot.lane.b32.xlu0 %v1899, 8
  %v1971 = vpop.permute.xlu0 %1970
  %1972 = vrot.lane.b32.xlu0 %v1901, 8
  %v1973 = vpop.permute.xlu0 %1972
  %1974 = vrot.lane.b32.xlu0 %v1903, 8
  %v1975 = vpop.permute.xlu0 %1974
  %1976 = vrot.lane.b32.xlu0 %v1905, 8
  %v1977 = vpop.permute.xlu0 %1976
  %1978 = vrot.lane.b32.xlu0 %v1907, 8
  %v1979 = vpop.permute.xlu0 %1978
  %1980 = vrot.lane.b32.xlu0 %v1909, 8
  %v1981 = vpop.permute.xlu0 %1980
  %1982 = vrot.lane.b32.xlu0 %v1911, 8
  %v1983 = vpop.permute.xlu0 %1982
  %1984 = vrot.lane.b32.xlu0 %v1913, 8
  %v1985 = vpop.permute.xlu0 %1984
  %1986 = vrot.lane.b32.xlu0 %v1915, 8
  %v1987 = vpop.permute.xlu0 %1986
  %1988 = vrot.lane.b32.xlu0 %v1917, 8
  %v1989 = vpop.permute.xlu0 %1988
  %1990 = vrot.lane.b32.xlu0 %v1919, 8
  %v1991 = vpop.permute.xlu0 %1990
  %1992 = vrot.lane.b32.xlu0 %v1921, 8
  %v1993 = vpop.permute.xlu0 %1992
  %1994 = vrot.lane.b32.xlu0 %v1923, 8
  %v1995 = vpop.permute.xlu0 %1994
  %1996 = vrot.lane.b32.xlu0 %v1925, 8
  %v1997 = vpop.permute.xlu0 %1996
  %1998 = vrot.lane.b32.xlu0 %v1927, 8
  %v1999 = vpop.permute.xlu0 %1998
  %2000 = vrot.lane.b32.xlu0 %v1929, 8
  %v2001 = vpop.permute.xlu0 %2000
  %2002 = vrot.lane.b32.xlu0 %v1931, 8
  %v2003 = vpop.permute.xlu0 %2002
  %2004 = vrot.lane.b32.xlu0 %v1933, 8
  %v2005 = vpop.permute.xlu0 %2004
  %2006 = vrot.lane.b32.xlu0 %v1935, 8
  %v2007 = vpop.permute.xlu0 %2006
  %2008 = vrot.lane.b32.xlu0 %v1937, 8
  %v2009 = vpop.permute.xlu0 %2008
  %2010 = vrot.lane.b32.xlu0 %v1939, 8
  %v2011 = vpop.permute.xlu0 %2010
  %2012 = vrot.lane.b32.xlu0 %v1941, 8
  %v2013 = vpop.permute.xlu0 %2012
  %2014 = vrot.lane.b32.xlu0 %v1943, 8
  %v2015 = vpop.permute.xlu0 %2014
  %2016 = vrot.lane.b32.xlu0 %v1945, 8
  %v2017 = vpop.permute.xlu0 %2016
  %2018 = vrot.lane.b32.xlu0 %v1947, 8
  %v2019 = vpop.permute.xlu0 %2018
  %2020 = vrot.lane.b32.xlu0 %v1949, 8
  %v2021 = vpop.permute.xlu0 %2020
  %2022 = vrot.lane.b32.xlu0 %v1951, 8
  %v2023 = vpop.permute.xlu0 %2022
  %2024 = vrot.lane.b32.xlu0 %v1953, 8
  %v2025 = vpop.permute.xlu0 %2024
  %2026 = vrot.lane.b32.xlu0 %v1955, 8
  %v2027 = vpop.permute.xlu0 %2026
  %2028 = vrot.lane.b32.xlu0 %v1957, 8
  %v2029 = vpop.permute.xlu0 %2028
  %2030 = vrot.lane.b32.xlu0 %v1959, 8
  %v2031 = vpop.permute.xlu0 %2030
  %2032 = vrot.lane.b32.xlu0 %v1961, 8
  %v2033 = vpop.permute.xlu0 %2032
  %2034 = vrot.lane.b32.xlu0 %v1963, 8
  %v2035 = vpop.permute.xlu0 %2034
  %2036 = vrot.lane.b32.xlu0 %v1965, 8
  %v2037 = vpop.permute.xlu0 %2036
  %2038 = vrot.lane.b32.xlu0 %v1967, 8
  %v2039 = vpop.permute.xlu0 %2038
  %v2076 = vsel %vm910, %v1859, %v1969
  %v2077 = vsel %vm910, %v1860, %v1971
  %v2078 = vsel %vm910, %v1861, %v1973
  %v2079 = vsel %vm910, %v1862, %v1975
  %v2080 = vsel %vm910, %v1863, %v1977
  %v2081 = vsel %vm910, %v1864, %v1979
  %v2082 = vsel %vm910, %v1865, %v1981
  %v2083 = vsel %vm910, %v1866, %v1983
  %v2084 = vsel %vm910, %v1867, %v1985
  %v2085 = vsel %vm910, %v1868, %v1987
  %v2086 = vsel %vm910, %v1869, %v1989
  %v2087 = vsel %vm910, %v1870, %v1991
  %v2088 = vsel %vm910, %v1871, %v1993
  %v2089 = vsel %vm910, %v1872, %v1995
  %v2090 = vsel %vm910, %v1873, %v1997
  %v2091 = vsel %vm910, %v1874, %v1999
  %v2092 = vsel %vm910, %v1875, %v2001
  %v2093 = vsel %vm910, %v1876, %v2003
  %v2094 = vsel %vm910, %v1877, %v2005
  %v2095 = vsel %vm910, %v1878, %v2007
  %v2096 = vsel %vm910, %v1879, %v2009
  %v2097 = vsel %vm910, %v1880, %v2011
  %v2098 = vsel %vm910, %v1881, %v2013
  %v2099 = vsel %vm910, %v1882, %v2015
  %v2100 = vsel %vm910, %v1883, %v2017
  %v2101 = vsel %vm910, %v1884, %v2019
  %v2102 = vsel %vm910, %v1885, %v2021
  %v2103 = vsel %vm910, %v1886, %v2023
  %v2104 = vsel %vm910, %v1887, %v2025
  %v2105 = vsel %vm910, %v1888, %v2027
  %v2106 = vsel %vm910, %v1889, %v2029
  %v2107 = vsel %vm910, %v1890, %v2031
  %v2108 = vsel %vm910, %v1891, %v2033
  %v2109 = vsel %vm910, %v1892, %v2035
  %v2110 = vsel %vm910, %v1893, %v2037
  %v2111 = vsel %vm910, %v1894, %v2039
  %v2112 = vld [vmem:[%s3] sm:$0xff]
  %v2113 = vld [vmem:[%s3 + $0x8] sm:$0x1f]
  %vm2114 = vcmask 105472
  %v2116 = vsel %vm2114, %v2076, 0
  %v2119 = vsel %vm2114, %v2077, 0
  %v2122 = vsel %vm2114, %v2078, 0
  %v2125 = vsel %vm2114, %v2079, 0
  %v2128 = vsel %vm2114, %v2080, 0
  %v2131 = vsel %vm2114, %v2081, 0
  %v2134 = vsel %vm2114, %v2082, 0
  %v2137 = vsel %vm2114, %v2083, 0
  %v2140 = vsel %vm2114, %v2084, 0
  %v2143 = vsel %vm2114, %v2085, 0
  %v2146 = vsel %vm2114, %v2086, 0
  %v2149 = vsel %vm2114, %v2087, 0
  %v2152 = vsel %vm2114, %v2088, 0
  %v2155 = vsel %vm2114, %v2089, 0
  %v2158 = vsel %vm2114, %v2090, 0
  %v2161 = vsel %vm2114, %v2091, 0
  %v2164 = vsel %vm2114, %v2092, 0
  %v2167 = vsel %vm2114, %v2093, 0
  %v2170 = vsel %vm2114, %v2094, 0
  %v2173 = vsel %vm2114, %v2095, 0
  %v2176 = vsel %vm2114, %v2096, 0
  %v2179 = vsel %vm2114, %v2097, 0
  %v2182 = vsel %vm2114, %v2098, 0
  %v2185 = vsel %vm2114, %v2099, 0
  %v2188 = vsel %vm2114, %v2100, 0
  %v2191 = vsel %vm2114, %v2101, 0
  %v2194 = vsel %vm2114, %v2102, 0
  %v2197 = vsel %vm2114, %v2103, 0
  %v2200 = vsel %vm2114, %v2104, 0
  %v2203 = vsel %vm2114, %v2105, 0
  %v2206 = vsel %vm2114, %v2106, 0
  %v2209 = vsel %vm2114, %v2107, 0
  %v2212 = vsel %vm2114, %v2108, 0
  %v2215 = vsel %vm2114, %v2109, 0
  %v2218 = vsel %vm2114, %v2110, 0
  %v2221 = vsel %vm2114, %v2111, 0
  %v2224 = vsel %vm187, %v2113, 0
  %2226 = vmatprep.subr.mxu0 0.0
  %2227 = vmatpush1.msra.mxu0 0.0
  %2228 = vmatprep.subr.mxu0 0.0
  %2229 = vmatpush1.msra.mxu0 0.0
  %2230 = vmatprep.subr.mxu0 0.0
  %2231 = vmatpush1.msra.mxu0 0.0
  %2232 = vmatprep.subr.mxu0 0.0
  %2233 = vmatpush1.msra.mxu0 0.0
  %2234 = vmatprep.subr.mxu0 0.0
  %2235 = vmatpush1.msra.mxu0 0.0
  %2236 = vmatprep.subr.mxu0 0.0
  %2237 = vmatpush1.msra.mxu0 0.0
  %2238 = vmatprep.subr.mxu0 0.0
  %2239 = vmatpush1.msra.mxu0 0.0
  %2240 = vmatprep.subr.mxu0 0.0
  %2241 = vmatpush1.msra.mxu0 0.0
  %2242 = vmatprep.subr.mxu0 0.0
  %2243 = vmatpush1.msra.mxu0 0.0
  %2244 = vmatprep.subr.mxu0 0.0
  %2245 = vmatpush1.msra.mxu0 0.0
  %2246 = vmatprep.subr.mxu0 0.0
  %2247 = vmatpush1.msra.mxu0 0.0
  %2248 = vmatprep.subr.mxu0 0.0
  %2249 = vmatpush1.msra.mxu0 0.0
  %2250 = vmatprep.subr.mxu0 0.0
  %2251 = vmatpush1.msra.mxu0 0.0
  %2252 = vmatprep.subr.mxu0 0.0
  %2253 = vmatpush1.msra.mxu0 0.0
  %2254 = vmatprep.subr.mxu0 0.0
  %2255 = vmatpush1.msra.mxu0 %v2224
  %2256 = vmatprep.subr.mxu0 0.0
  %2257 = vmatpush1.msra.mxu0 %v2112
  %2258 = vmatprep.subr.mxu0 0.0
  %2259 = vmatpush2.msra.mxu0 0.0
  %2260 = vmatprep.subr.mxu0 0.0
  %2261 = vmatpush2.msra.mxu0 0.0
  %2262 = vmatprep.subr.mxu0 0.0
  %2263 = vmatpush2.msra.mxu0 0.0
  %2264 = vmatprep.subr.mxu0 0.0
  %2265 = vmatpush2.msra.mxu0 0.0
  %2266 = vmatprep.subr.mxu0 0.0
  %2267 = vmatpush2.msra.mxu0 0.0
  %2268 = vmatprep.subr.mxu0 0.0
  %2269 = vmatpush2.msra.mxu0 0.0
  %2270 = vmatprep.subr.mxu0 0.0
  %2271 = vmatpush2.msra.mxu0 0.0
  %2272 = vmatprep.subr.mxu0 0.0
  %2273 = vmatpush2.msra.mxu0 0.0
  %2274 = vmatprep.subr.mxu0 0.0
  %2275 = vmatpush2.msra.mxu0 0.0
  %2276 = vmatprep.subr.mxu0 0.0
  %2277 = vmatpush2.msra.mxu0 0.0
  %2278 = vmatprep.subr.mxu0 0.0
  %2279 = vmatpush2.msra.mxu0 0.0
  %2280 = vmatprep.subr.mxu0 0.0
  %2281 = vmatpush2.msra.mxu0 0.0
  %2282 = vmatprep.subr.mxu0 0.0
  %2283 = vmatpush2.msra.mxu0 0.0
  %2284 = vmatprep.subr.mxu0 0.0
  %2285 = vmatpush2.msra.mxu0 0.0
  %2286 = vmatprep.subr.mxu0 0.0
  %2287 = vmatpush2.msra.mxu0 0.0
  %2288 = vmatprep.subr.mxu0 0.0
  %2289 = vmatpush2.msra.mxu0 0.0
  %2290 = vmatprep.mubr.f32.mxu0 0.0
  %2291 = vmatmul.mubr.f32.gmra.mxu0 %v2116
  %v2292 = vpop.f32.mrf.mxu0
  %v2293 = vadd.f32 0.0, %v2292
  %v2294 = vpop.f32.mrf.mxu0
  %2295 = vmatprep.mubr.f32.mxu0 0.0
  %2296 = vmatmul.mubr.f32.gmra.mxu0 %v2119
  %v2297 = vpop.f32.mrf.mxu0
  %v2298 = vadd.f32 0.0, %v2297
  %v2299 = vpop.f32.mrf.mxu0
  %2300 = vmatprep.mubr.f32.mxu0 0.0
  %2301 = vmatmul.mubr.f32.gmra.mxu0 %v2122
  %v2302 = vpop.f32.mrf.mxu0
  %v2303 = vadd.f32 0.0, %v2302
  %v2304 = vpop.f32.mrf.mxu0
  %2305 = vmatprep.mubr.f32.mxu0 0.0
  %2306 = vmatmul.mubr.f32.gmra.mxu0 %v2125
  %v2307 = vpop.f32.mrf.mxu0
  %v2308 = vadd.f32 0.0, %v2307
  %v2309 = vpop.f32.mrf.mxu0
  %2310 = vmatprep.mubr.f32.mxu0 0.0
  %2311 = vmatmul.mubr.f32.gmra.mxu0 %v2128
  %v2312 = vpop.f32.mrf.mxu0
  %v2313 = vadd.f32 0.0, %v2312
  %v2314 = vpop.f32.mrf.mxu0
  %2315 = vmatprep.mubr.f32.mxu0 0.0
  %2316 = vmatmul.mubr.f32.gmra.mxu0 %v2131
  %v2317 = vpop.f32.mrf.mxu0
  %v2318 = vadd.f32 0.0, %v2317
  %v2319 = vpop.f32.mrf.mxu0
  %2320 = vmatprep.mubr.f32.mxu0 0.0
  %2321 = vmatmul.mubr.f32.gmra.mxu0 %v2134
  %v2322 = vpop.f32.mrf.mxu0
  %v2323 = vadd.f32 0.0, %v2322
  %v2324 = vpop.f32.mrf.mxu0
  %2325 = vmatprep.mubr.f32.mxu0 0.0
  %2326 = vmatmul.mubr.f32.gmra.mxu0 %v2137
  %v2327 = vpop.f32.mrf.mxu0
  %v2328 = vadd.f32 0.0, %v2327
  %v2329 = vpop.f32.mrf.mxu0
  %2330 = vmatprep.mubr.f32.mxu0 0.0
  %2331 = vmatmul.mubr.f32.gmra.mxu0 %v2140
  %v2332 = vpop.f32.mrf.mxu0
  %v2333 = vadd.f32 0.0, %v2332
  %v2334 = vpop.f32.mrf.mxu0
  %2335 = vmatprep.mubr.f32.mxu0 0.0
  %2336 = vmatmul.mubr.f32.gmra.mxu0 %v2143
  %v2337 = vpop.f32.mrf.mxu0
  %v2338 = vadd.f32 0.0, %v2337
  %v2339 = vpop.f32.mrf.mxu0
  %2340 = vmatprep.mubr.f32.mxu0 0.0
  %2341 = vmatmul.mubr.f32.gmra.mxu0 %v2146
  %v2342 = vpop.f32.mrf.mxu0
  %v2343 = vadd.f32 0.0, %v2342
  %v2344 = vpop.f32.mrf.mxu0
  %2345 = vmatprep.mubr.f32.mxu0 0.0
  %2346 = vmatmul.mubr.f32.gmra.mxu0 %v2149
  %v2347 = vpop.f32.mrf.mxu0
  %v2348 = vadd.f32 0.0, %v2347
  %v2349 = vpop.f32.mrf.mxu0
  %2350 = vmatprep.mubr.f32.mxu0 0.0
  %2351 = vmatmul.mubr.f32.gmra.mxu0 %v2152
  %v2352 = vpop.f32.mrf.mxu0
  %v2353 = vadd.f32 0.0, %v2352
  %v2354 = vpop.f32.mrf.mxu0
  %2355 = vmatprep.mubr.f32.mxu0 0.0
  %2356 = vmatmul.mubr.f32.gmra.mxu0 %v2155
  %v2357 = vpop.f32.mrf.mxu0
  %v2358 = vadd.f32 0.0, %v2357
  %v2359 = vpop.f32.mrf.mxu0
  %2360 = vmatprep.mubr.f32.mxu0 0.0
  %2361 = vmatmul.mubr.f32.gmra.mxu0 %v2158
  %v2362 = vpop.f32.mrf.mxu0
  %v2363 = vadd.f32 0.0, %v2362
  %v2364 = vpop.f32.mrf.mxu0
  %2365 = vmatprep.mubr.f32.mxu0 0.0
  %2366 = vmatmul.mubr.f32.gmra.mxu0 %v2161
  %v2367 = vpop.f32.mrf.mxu0
  %v2368 = vadd.f32 0.0, %v2367
  %v2369 = vpop.f32.mrf.mxu0
  %2370 = vmatprep.mubr.f32.mxu0 0.0
  %2371 = vmatmul.mubr.f32.gmra.mxu0 %v2164
  %v2372 = vpop.f32.mrf.mxu0
  %v2373 = vadd.f32 0.0, %v2372
  %v2374 = vpop.f32.mrf.mxu0
  %2375 = vmatprep.mubr.f32.mxu0 0.0
  %2376 = vmatmul.mubr.f32.gmra.mxu0 %v2167
  %v2377 = vpop.f32.mrf.mxu0
  %v2378 = vadd.f32 0.0, %v2377
  %v2379 = vpop.f32.mrf.mxu0
  %2380 = vmatprep.mubr.f32.mxu0 0.0
  %2381 = vmatmul.mubr.f32.gmra.mxu0 %v2170
  %v2382 = vpop.f32.mrf.mxu0
  %v2383 = vadd.f32 0.0, %v2382
  %v2384 = vpop.f32.mrf.mxu0
  %2385 = vmatprep.mubr.f32.mxu0 0.0
  %2386 = vmatmul.mubr.f32.gmra.mxu0 %v2173
  %v2387 = vpop.f32.mrf.mxu0
  %v2388 = vadd.f32 0.0, %v2387
  %v2389 = vpop.f32.mrf.mxu0
  %2390 = vmatprep.mubr.f32.mxu0 0.0
  %2391 = vmatmul.mubr.f32.gmra.mxu0 %v2176
  %v2392 = vpop.f32.mrf.mxu0
  %v2393 = vadd.f32 0.0, %v2392
  %v2394 = vpop.f32.mrf.mxu0
  %2395 = vmatprep.mubr.f32.mxu0 0.0
  %2396 = vmatmul.mubr.f32.gmra.mxu0 %v2179
  %v2397 = vpop.f32.mrf.mxu0
  %v2398 = vadd.f32 0.0, %v2397
  %v2399 = vpop.f32.mrf.mxu0
  %2400 = vmatprep.mubr.f32.mxu0 0.0
  %2401 = vmatmul.mubr.f32.gmra.mxu0 %v2182
  %v2402 = vpop.f32.mrf.mxu0
  %v2403 = vadd.f32 0.0, %v2402
  %v2404 = vpop.f32.mrf.mxu0
  %2405 = vmatprep.mubr.f32.mxu0 0.0
  %2406 = vmatmul.mubr.f32.gmra.mxu0 %v2185
  %v2407 = vpop.f32.mrf.mxu0
  %v2408 = vadd.f32 0.0, %v2407
  %v2409 = vpop.f32.mrf.mxu0
  %2410 = vmatprep.mubr.f32.mxu0 0.0
  %2411 = vmatmul.mubr.f32.gmra.mxu0 %v2188
  %v2412 = vpop.f32.mrf.mxu0
  %v2413 = vadd.f32 0.0, %v2412
  %v2414 = vpop.f32.mrf.mxu0
  %2415 = vmatprep.mubr.f32.mxu0 0.0
  %2416 = vmatmul.mubr.f32.gmra.mxu0 %v2191
  %v2417 = vpop.f32.mrf.mxu0
  %v2418 = vadd.f32 0.0, %v2417
  %v2419 = vpop.f32.mrf.mxu0
  %2420 = vmatprep.mubr.f32.mxu0 0.0
  %2421 = vmatmul.mubr.f32.gmra.mxu0 %v2194
  %v2422 = vpop.f32.mrf.mxu0
  %v2423 = vadd.f32 0.0, %v2422
  %v2424 = vpop.f32.mrf.mxu0
  %2425 = vmatprep.mubr.f32.mxu0 0.0
  %2426 = vmatmul.mubr.f32.gmra.mxu0 %v2197
  %v2427 = vpop.f32.mrf.mxu0
  %v2428 = vadd.f32 0.0, %v2427
  %v2429 = vpop.f32.mrf.mxu0
  %2430 = vmatprep.mubr.f32.mxu0 0.0
  %2431 = vmatmul.mubr.f32.gmra.mxu0 %v2200
  %v2432 = vpop.f32.mrf.mxu0
  %v2433 = vadd.f32 0.0, %v2432
  %v2434 = vpop.f32.mrf.mxu0
  %2435 = vmatprep.mubr.f32.mxu0 0.0
  %2436 = vmatmul.mubr.f32.gmra.mxu0 %v2203
  %v2437 = vpop.f32.mrf.mxu0
  %v2438 = vadd.f32 0.0, %v2437
  %v2439 = vpop.f32.mrf.mxu0
  %2440 = vmatprep.mubr.f32.mxu0 0.0
  %2441 = vmatmul.mubr.f32.gmra.mxu0 %v2206
  %v2442 = vpop.f32.mrf.mxu0
  %v2443 = vadd.f32 0.0, %v2442
  %v2444 = vpop.f32.mrf.mxu0
  %2445 = vmatprep.mubr.f32.mxu0 0.0
  %2446 = vmatmul.mubr.f32.gmra.mxu0 %v2209
  %v2447 = vpop.f32.mrf.mxu0
  %v2448 = vadd.f32 0.0, %v2447
  %v2449 = vpop.f32.mrf.mxu0
  %2450 = vmatprep.mubr.f32.mxu0 0.0
  %2451 = vmatmul.mubr.f32.gmra.mxu0 %v2212
  %v2452 = vpop.f32.mrf.mxu0
  %v2453 = vadd.f32 0.0, %v2452
  %v2454 = vpop.f32.mrf.mxu0
  %2455 = vmatprep.mubr.f32.mxu0 0.0
  %2456 = vmatmul.mubr.f32.gmra.mxu0 %v2215
  %v2457 = vpop.f32.mrf.mxu0
  %v2458 = vadd.f32 0.0, %v2457
  %v2459 = vpop.f32.mrf.mxu0
  %2460 = vmatprep.mubr.f32.mxu0 0.0
  %2461 = vmatmul.mubr.f32.gmra.mxu0 %v2218
  %v2462 = vpop.f32.mrf.mxu0
  %v2463 = vadd.f32 0.0, %v2462
  %v2464 = vpop.f32.mrf.mxu0
  %2465 = vmatprep.mubr.f32.mxu0 0.0
  %2466 = vmatmul.mubr.f32.gmra.mxu0 %v2221
  %v2467 = vpop.f32.mrf.mxu0
  %v2468 = vadd.f32 0.0, %v2467
  %v2469 = vpop.f32.mrf.mxu0
  %2470 = vdwg.mxu0
  %2471 = vst.msk [vmem:[%s4] sm:$0xff] %vm951, %v2293
  %2472 = vst.msk [vmem:[%s4 + $0x8] sm:$0xff] %vm951, %v2298
  %2473 = vst.msk [vmem:[%s4 + $0x10] sm:$0xff] %vm951, %v2303
  %2474 = vst.msk [vmem:[%s4 + $0x18] sm:$0xff] %vm951, %v2308
  %2475 = vst.msk [vmem:[%s4 + $0x20] sm:$0xff] %vm951, %v2313
  %2476 = vst.msk [vmem:[%s4 + $0x28] sm:$0xff] %vm951, %v2318
  %2477 = vst.msk [vmem:[%s4 + $0x30] sm:$0xff] %vm951, %v2323
  %2478 = vst.msk [vmem:[%s4 + $0x38] sm:$0xff] %vm951, %v2328
  %2479 = vst.msk [vmem:[%s4 + $0x40] sm:$0xff] %vm951, %v2333
  %2480 = vst.msk [vmem:[%s4 + $0x48] sm:$0xff] %vm951, %v2338
  %2481 = vst.msk [vmem:[%s4 + $0x50] sm:$0xff] %vm951, %v2343
  %2482 = vst.msk [vmem:[%s4 + $0x58] sm:$0xff] %vm951, %v2348
  %2483 = vst.msk [vmem:[%s4 + $0x60] sm:$0xff] %vm951, %v2353
  %2484 = vst.msk [vmem:[%s4 + $0x68] sm:$0xff] %vm951, %v2358
  %2485 = vst.msk [vmem:[%s4 + $0x70] sm:$0xff] %vm951, %v2363
  %2486 = vst.msk [vmem:[%s4 + $0x78] sm:$0xff] %vm951, %v2368
  %2487 = vst.msk [vmem:[%s4 + $0x80] sm:$0xff] %vm951, %v2373
  %2488 = vst.msk [vmem:[%s4 + $0x88] sm:$0xff] %vm951, %v2378
  %2489 = vst.msk [vmem:[%s4 + $0x90] sm:$0xff] %vm951, %v2383
  %2490 = vst.msk [vmem:[%s4 + $0x98] sm:$0xff] %vm951, %v2388
  %2491 = vst.msk [vmem:[%s4 + $0xa0] sm:$0xff] %vm951, %v2393
  %2492 = vst.msk [vmem:[%s4 + $0xa8] sm:$0xff] %vm951, %v2398
  %2493 = vst.msk [vmem:[%s4 + $0xb0] sm:$0xff] %vm951, %v2403
  %2494 = vst.msk [vmem:[%s4 + $0xb8] sm:$0xff] %vm951, %v2408
  %2495 = vst.msk [vmem:[%s4 + $0xc0] sm:$0xff] %vm951, %v2413
  %2496 = vst.msk [vmem:[%s4 + $0xc8] sm:$0xff] %vm951, %v2418
  %2497 = vst.msk [vmem:[%s4 + $0xd0] sm:$0xff] %vm951, %v2423
  %2498 = vst.msk [vmem:[%s4 + $0xd8] sm:$0xff] %vm951, %v2428
  %2499 = vst.msk [vmem:[%s4 + $0xe0] sm:$0xff] %vm951, %v2433
  %2500 = vst.msk [vmem:[%s4 + $0xe8] sm:$0xff] %vm951, %v2438
  %2501 = vst.msk [vmem:[%s4 + $0xf0] sm:$0xff] %vm951, %v2443
  %2502 = vst.msk [vmem:[%s4 + $0xf8] sm:$0xff] %vm951, %v2448
  %2503 = vst.msk [vmem:[%s4 + $0x100] sm:$0xff] %vm951, %v2453
  %2504 = vst.msk [vmem:[%s4 + $0x108] sm:$0xff] %vm951, %v2458
  %2505 = vst.msk [vmem:[%s4 + $0x110] sm:$0xff] %vm951, %v2463
  %2506 = vst.msk [vmem:[%s4 + $0x118] sm:$0xff] %vm951, %v2468
  // Predicated region
  $region18: #{down_sample_block.1} parent=0 // pred_check
    _
  $region19: #{down_sample_block.1} parent=0 // pred_check_branch
    %2508 = sbr.rel (0) target = $region21
  $region20: #{down_sample_block.1} parent=0 // pred_region
    _
  $region21: #{down_sample_block.1} parent=0 // pred_fallthru
    _
  // Predicated region
  $region22: #{down_sample_block.1} parent=0 // pred_check
    _
  $region23: #{down_sample_block.1} parent=0 // pred_check_branch
    %2510 = sbr.rel (0) target = $region25
  $region24: #{down_sample_block.1} parent=0 // pred_region
    _
  $region25: #{down_sample_block.1} parent=0 // pred_fallthru
    _

</llo_original>
